<compile_context>
chip_gen: v7x
topology: tpu7x:2x2x1
jax: 0.10.0
libtpu: 0.0.40
codegen_flags: <defaults>
</compile_context>

<pallas_src>
import functools

import jax
import jax.numpy as jnp
import numpy as np
from jax.experimental import pallas as pl
from jax.experimental.pallas import tpu as pltpu

PAD_IDX = 1          # tgt_dict.stoi[onmt.io.PAD_WORD]
NEG = -1e30          # large finite negative: avoids (+inf) + (-inf) -> NaN
GATE_PAD = 128       # the 3 copy-gate logits padded to a full lane tile
LANE = 128
SUBLANE = 8


def _round_up(x, m):
    return ((x + m - 1) // m) * m


# ---------------------------------------------------------------------------
# Fused kernel.  One grid cell = (one batch element) x (one tile of t rows):
#   fused [D, vocab_pad + 128] projection (bf16 MXU, f32 accumulation)
#   softmax over tgt vocab   (PAD & padding columns pre-masked via bias=-1e30)
#   log-softmax over the 3 copy-gate logits (padded to 128 lanes)
#   softmax-normalisation * gate0 fused into one reciprocal-scaled multiply
#   gated attention -> plain 2-D dots against this batch's src maps
# ---------------------------------------------------------------------------
def _copygen_kernel(hidden_ref, attn_ref, attn_plan_ref, wt_ref, b_ref,
                    src_map_ref, src_map_plan_ref,
                    out_prob_ref, ct_ref, cp_ref, p_copy_ref,
                    *, vocab_pad):
    h = hidden_ref[0]                                         # [t_tile, D] bf16

    # One fused projection for vocab logits + copy-gate logits (f32 accum).
    logits_all = jnp.dot(h, wt_ref[...],
                         preferred_element_type=jnp.float32) + b_ref[...]
    logits = logits_all[:, :vocab_pad]                        # [t_tile, Vpad]
    copy_logits = logits_all[:, vocab_pad:]                   # [t_tile, 128]

    # Softmax over the target vocabulary.  PAD and padding columns carry a
    # -1e30 bias (and zeroed weight columns), so exp() underflows them to 0.
    m = jnp.max(logits, axis=-1, keepdims=True)
    e = jnp.exp(logits - m)
    denom = jnp.sum(e, axis=-1, keepdims=True)

    # p_copy = log_softmax over the 3 gate logits (padded columns at -1e30).
    mc = jnp.max(copy_logits, axis=-1, keepdims=True)
    lse = jnp.log(jnp.sum(jnp.exp(copy_logits - mc), axis=-1,
                          keepdims=True)) + mc
    p_copy = copy_logits - lse
    p_copy_ref[0] = p_copy
    gates = jnp.exp(p_copy)                                   # [t_tile, 128]

    # Fold softmax normalisation and gate 0 into a single broadcast multiply.
    scale = gates[:, 0:1] * pl.reciprocal(denom, approx=True)
    out_prob_ref[0] = e * scale

    # Gated attention -> per-batch 2-D MXU dots (no 3-D reshape / einsum).
    mul_attn = attn_ref[0] * gates[:, 1:2]                    # [t_tile, Spad]
    mul_attn_plan = attn_plan_ref[0] * gates[:, 2:3]
    ct_ref[0] = jnp.dot(mul_attn, src_map_ref[0],
                        preferred_element_type=jnp.float32)
    cp_ref[0] = jnp.dot(mul_attn_plan, src_map_plan_ref[0],
                        preferred_element_type=jnp.float32)


# ---------------------------------------------------------------------------
# CopyGenerator forward (wrapper)
# ---------------------------------------------------------------------------
def copy_generator_forward(hidden, attn, src_map, attn_plan, src_map_plan,
                           w, b, wc, bc, *, tile_rows=256,
                           matmul_dtype=jnp.bfloat16):
    n, d = hidden.shape
    slen, batch, cvocab = src_map.shape
    slen_p, batch_p, cvocab_p = src_map_plan.shape
    assert batch_p == batch, "src_map and src_map_plan batch must match"
    assert n % batch == 0
    assert attn.shape == (n, slen) and attn_plan.shape == (n, slen_p)
    vocab = w.shape[0]
    assert 0 <= PAD_IDX < vocab
    tlen = n // batch
    f32 = jnp.float32

    # Lane / sublane aligned padded sizes (zero padding is numerically exact).
    vocab_pad = _round_up(vocab, LANE)
    cvocab_pad = _round_up(cvocab, LANE)
    cvocab_plan_pad = _round_up(cvocab_p, LANE)
    slen_pad = _round_up(slen, SUBLANE)
    slen_plan_pad = _round_up(slen_p, SUBLANE)
    v_all = vocab_pad + GATE_PAD

    # Row tile over t (per batch element); multiple of 16 for bf16 sublanes.
    # Grid is padded (cdiv-style); padded rows are sliced off at the end.
    t_tile = max(16, _round_up(min(tile_rows, tlen), 16))
    tlen_pad = _round_up(tlen, t_tile)
    grid = (batch, tlen_pad // t_tile)

    # --- Fused, padded, pre-transposed projection weight / bias -------------
    # PAD handling folded in: PAD weight column zeroed, PAD bias and all
    # padding columns set to -1e30 (finite), so the kernel needs no mask.
    wt_main = jnp.zeros((d, vocab_pad), f32).at[:, :vocab].set(w.T.astype(f32))
    wt_main = wt_main.at[:, PAD_IDX].set(0.0)
    wt_gate = jnp.zeros((d, GATE_PAD), f32).at[:, :3].set(wc.T.astype(f32))
    wt_all = jnp.concatenate([wt_main, wt_gate], axis=1).astype(matmul_dtype)

    b_main = jnp.full((vocab_pad,), NEG, f32).at[:vocab].set(b.astype(f32))
    b_main = b_main.at[PAD_IDX].set(NEG)
    b_gate = jnp.full((GATE_PAD,), NEG, f32).at[:3].set(bc.astype(f32))
    b_all = jnp.concatenate([b_main, b_gate]).reshape(1, v_all)

    # --- Batch-leading, zero-padded operand layouts (layout plumbing) -------
    def to_batch_leading(x, last_pad):
        x3 = jnp.transpose(x.reshape(tlen, batch, x.shape[-1]), (1, 0, 2))
        return jnp.pad(x3, ((0, 0), (0, tlen_pad - tlen),
                            (0, last_pad - x.shape[-1])))

    hidden_b = to_batch_leading(hidden, d).astype(matmul_dtype)     # [B,Tp,D]
    attn_b = to_batch_leading(attn.astype(f32), slen_pad)
    attn_plan_b = to_batch_leading(attn_plan.astype(f32), slen_plan_pad)

    src_map_b = jnp.pad(jnp.transpose(src_map.astype(f32), (1, 0, 2)),
                        ((0, 0), (0, slen_pad - slen),
                         (0, cvocab_pad - cvocab)))
    src_map_plan_b = jnp.pad(jnp.transpose(src_map_plan.astype(f32), (1, 0, 2)),
                             ((0, 0), (0, slen_plan_pad - slen_p),
                              (0, cvocab_plan_pad - cvocab_p)))

    kernel = functools.partial(_copygen_kernel, vocab_pad=vocab_pad)

    out_shapes = (
        jax.ShapeDtypeStruct((batch, tlen_pad, vocab_pad), f32),
        jax.ShapeDtypeStruct((batch, tlen_pad, cvocab_pad), f32),
        jax.ShapeDtypeStruct((batch, tlen_pad, cvocab_plan_pad), f32),
        jax.ShapeDtypeStruct((batch, tlen_pad, GATE_PAD), f32),
    )

    def run(single_buffer_residents):
        res_kw = ({"pipeline_mode": pl.Buffered(1)}
                  if single_buffer_residents else {})
        row = lambda bb, ii: (bb, ii, 0)
        per_batch = lambda bb, ii: (bb, 0, 0)
        const2 = lambda bb, ii: (0, 0)
        grid_spec = pltpu.PrefetchScalarGridSpec(
            num_scalar_prefetch=0,
            grid=grid,
            in_specs=[
                pl.BlockSpec((1, t_tile, d), row),                   # hidden
                pl.BlockSpec((1, t_tile, slen_pad), row),            # attn
                pl.BlockSpec((1, t_tile, slen_plan_pad), row),       # attn_plan
                pl.BlockSpec((d, v_all), const2, **res_kw),          # W^T fused (resident)
                pl.BlockSpec((1, v_all), const2, **res_kw),          # bias (resident)
                pl.BlockSpec((1, slen_pad, cvocab_pad), per_batch),  # src_map[b]
                pl.BlockSpec((1, slen_plan_pad, cvocab_plan_pad), per_batch),
            ],
            out_specs=(
                pl.BlockSpec((1, t_tile, vocab_pad), row),
                pl.BlockSpec((1, t_tile, cvocab_pad), row),
                pl.BlockSpec((1, t_tile, cvocab_plan_pad), row),
                pl.BlockSpec((1, t_tile, GATE_PAD), row),
            ))
        return pl.pallas_call(
            kernel,
            out_shape=out_shapes,
            grid_spec=grid_spec,
            compiler_params=pltpu.CompilerParams(
                dimension_semantics=("parallel", "parallel"),
                vmem_limit_bytes=64 * 1024 * 1024),
        )(hidden_b, attn_b, attn_plan_b, wt_all, b_all,
          src_map_b, src_map_plan_b)

    # TODO(synk): for production vocab (~50k) the fused weight must be streamed
    # over a second vocab-tile grid axis (online / two-pass softmax), and the
    # one-hot src_map bmm replaced by a scalar-prefetch gather over src indices.
    try:
        out_prob_b, ct_b, cp_b, p_copy_b = run(True)
    except Exception:
        # Fallback for Pallas versions without BlockSpec(pipeline_mode=...).
        out_prob_b, ct_b, cp_b, p_copy_b = run(False)

    # --- Un-pad and restore the original [tlen*batch, ...] row order --------
    def unpack(x_b, width):
        x = x_b[:, :tlen, :width]                       # [B, tlen, width]
        return jnp.transpose(x, (1, 0, 2)).reshape(n, width)

    out_prob = unpack(out_prob_b, vocab)
    copy_table_prob = unpack(ct_b, cvocab)
    copy_plan_prob = unpack(cp_b, cvocab_p)
    p_copy = unpack(p_copy_b, 3)
    out_full = jnp.concatenate([out_prob, copy_table_prob, copy_plan_prob],
                               axis=1)
    return out_full, p_copy, cvocab


# ---------------------------------------------------------------------------
# Pure-JAX reference for verification (optionally mirrors the bf16 matmuls)
# ---------------------------------------------------------------------------
def _reference(hidden, attn, src_map, attn_plan, src_map_plan, w, b, wc, bc,
               matmul_dtype=jnp.float32):
    n = hidden.shape[0]
    slen, batch, cvocab = src_map.shape
    slen_plan, batch_plan, cvocab_plan = src_map_plan.shape
    tlen = n // batch

    hm = hidden.astype(matmul_dtype)
    logits = jnp.dot(hm, w.astype(matmul_dtype).T,
                     preferred_element_type=jnp.float32) + b
    logits = logits.at[:, PAD_IDX].set(-jnp.inf)
    prob = jax.nn.softmax(logits, axis=-1)
    copy_logits = jnp.dot(hm, wc.astype(matmul_dtype).T,
                          preferred_element_type=jnp.float32) + bc
    p_copy = jax.nn.log_softmax(copy_logits, axis=-1)
    out_prob = prob * jnp.exp(p_copy[:, 0:1])
    mul_attn = attn * jnp.exp(p_copy[:, 1:2])
    mul_attn_plan = attn_plan * jnp.exp(p_copy[:, 2:3])

    ct = jnp.einsum('bts,bsc->btc',
                    mul_attn.reshape(tlen, batch, slen).transpose(1, 0, 2),
                    src_map.transpose(1, 0, 2))
    ct = ct.transpose(1, 0, 2).reshape(-1, cvocab)
    cp = jnp.einsum('bts,bsc->btc',
                    mul_attn_plan.reshape(tlen, batch_plan, slen_plan).transpose(1, 0, 2),
                    src_map_plan.transpose(1, 0, 2))
    cp = cp.transpose(1, 0, 2).reshape(-1, cvocab_plan)
    return jnp.concatenate([out_prob, ct, cp], axis=1), p_copy


if __name__ == "__main__":
    key = jax.random.PRNGKey(0)
    k = jax.random.split(key, 10)

    # Small shapes consistent with the module's forward.
    input_size = 32
    vocab = 16          # len(tgt_dict)
    batch = 2
    tlen = 32
    N = batch * tlen
    slen, cvocab = 8, 8
    slen_plan, cvocab_plan = 6, 4

    # nn.Linear shapes: weight [out, in], bias [out].
    w = jax.random.normal(k[0], (vocab, input_size), jnp.float32) * 0.1
    b = jax.random.normal(k[1], (vocab,), jnp.float32) * 0.1
    wc = jax.random.normal(k[2], (3, input_size), jnp.float32) * 0.1
    bc = jax.random.normal(k[3], (3,), jnp.float32) * 0.1

    # Inputs (rows are tlen-major, batch-minor, like OpenNMT's flattening).
    hidden = jax.random.normal(k[4], (N, input_size), jnp.float32)
    attn = jax.nn.softmax(jax.random.normal(k[5], (N, slen), jnp.float32), axis=-1)
    attn_plan = jax.nn.softmax(jax.random.normal(k[6], (N, slen_plan), jnp.float32), axis=-1)
    src_idx = jax.random.randint(k[7], (slen, batch), 0, cvocab)
    src_map = jax.nn.one_hot(src_idx, cvocab, dtype=jnp.float32)             # [slen, B, cvocab]
    plan_idx = jax.random.randint(k[8], (slen_plan, batch), 0, cvocab_plan)
    src_map_plan = jax.nn.one_hot(plan_idx, cvocab_plan, dtype=jnp.float32)  # [slen_plan, B, cvocab_plan]

    # tile_rows=16 -> 2 t-tiles per batch element -> pipelined (2, 2) grid.
    out, p_copy, copy_size = copy_generator_forward(
        hidden, attn, src_map, attn_plan, src_map_plan, w, b, wc, bc,
        tile_rows=16)
    out = jax.block_until_ready(out)
    p_copy = jax.block_until_ready(p_copy)

    # Reference mirrors the bf16 matmul operands; remaining differences are the
    # approximate reciprocal (vocab softmax only) and f32 accumulation order.
    ref_out, ref_pc = _reference(hidden, attn, src_map, attn_plan, src_map_plan,
                                 w, b, wc, bc, matmul_dtype=jnp.bfloat16)
    np.testing.assert_allclose(np.asarray(out), np.asarray(ref_out),
                               rtol=2e-2, atol=1e-3)
    np.testing.assert_allclose(np.asarray(p_copy), np.asarray(ref_pc),
                               rtol=1e-4, atol=1e-5)
    assert copy_size == cvocab
    assert out.shape == (N, vocab + cvocab + cvocab_plan)
    assert p_copy.shape == (N, 3)

    print("KERNEL_OK")
</pallas_src>

<mosaic_0001>
module attributes {stable_mosaic.version = 11 : i64} {
  func.func @_copygen_kernel(%arg0: i32, %arg1: i32, %arg2: memref<1x16x32xbf16, #tpu.memory_space<vmem>>, %arg3: memref<1x16x8xf32, #tpu.memory_space<vmem>>, %arg4: memref<1x16x8xf32, #tpu.memory_space<vmem>>, %arg5: memref<32x256xbf16, #tpu.memory_space<vmem>>, %arg6: memref<1x256xf32, #tpu.memory_space<vmem>>, %arg7: memref<1x8x128xf32, #tpu.memory_space<vmem>>, %arg8: memref<1x8x128xf32, #tpu.memory_space<vmem>>, %arg9: memref<1x16x128xf32, #tpu.memory_space<vmem>>, %arg10: memref<1x16x128xf32, #tpu.memory_space<vmem>>, %arg11: memref<1x16x128xf32, #tpu.memory_space<vmem>>, %arg12: memref<1x16x128xf32, #tpu.memory_space<vmem>>) attributes {dimension_semantics = [#tpu.dimension_semantics<parallel>, #tpu.dimension_semantics<parallel>], iteration_bounds = array<i64: 2, 2>, scalar_prefetch = 0 : i64, scratch_operands = 0 : i64, tpu.core_type = #tpu.core_type<tc>, window_params = [{transform_indices = @transform_0, window_bounds = array<i64: 1, 16, 32>}, {transform_indices = @transform_1, window_bounds = array<i64: 1, 16, 8>}, {transform_indices = @transform_2, window_bounds = array<i64: 1, 16, 8>}, {pipeline_mode = #tpu.pipeline_mode<synchronous>, transform_indices = @transform_3, window_bounds = array<i64: 32, 256>}, {pipeline_mode = #tpu.pipeline_mode<synchronous>, transform_indices = @transform_4, window_bounds = array<i64: 1, 256>}, {transform_indices = @transform_5, window_bounds = array<i64: 1, 8, 128>}, {transform_indices = @transform_6, window_bounds = array<i64: 1, 8, 128>}, {transform_indices = @transform_7, window_bounds = array<i64: 1, 16, 128>}, {transform_indices = @transform_8, window_bounds = array<i64: 1, 16, 128>}, {transform_indices = @transform_9, window_bounds = array<i64: 1, 16, 128>}, {transform_indices = @transform_10, window_bounds = array<i64: 1, 16, 128>}]} {
    %c0 = arith.constant 0 : index
    %c0_0 = arith.constant 0 : index
    %c0_1 = arith.constant 0 : index
    %0 = vector.load %arg2[%c0, %c0_0, %c0_1] : memref<1x16x32xbf16, #tpu.memory_space<vmem>>, vector<1x16x32xbf16>
    %1 = vector.shape_cast %0 : vector<1x16x32xbf16> to vector<16x32xbf16>
    %c0_2 = arith.constant 0 : index
    %c0_3 = arith.constant 0 : index
    %2 = vector.load %arg5[%c0_2, %c0_3] : memref<32x256xbf16, #tpu.memory_space<vmem>>, vector<32x256xbf16>
    %cst = arith.constant dense<0.000000e+00> : vector<16x256xf32>
    %3 = tpu.matmul %1, %2, %cst {dimension_numbers = #tpu.dot_dimension_numbers<[1], [0], [0], [1], [0, 0, 1, 1], [], []>} : vector<16x32xbf16>, vector<32x256xbf16>, vector<16x256xf32> -> vector<16x256xf32>
    %c0_4 = arith.constant 0 : index
    %c0_5 = arith.constant 0 : index
    %4 = vector.load %arg6[%c0_4, %c0_5] : memref<1x256xf32, #tpu.memory_space<vmem>>, vector<1x256xf32>
    %5 = vector.broadcast %4 : vector<1x256xf32> to vector<16x256xf32>
    %6 = arith.addf %3, %5 : vector<16x256xf32>
    %7 = vector.extract_strided_slice %6 {offsets = [0, 0], sizes = [16, 128], strides = [1, 1]} : vector<16x256xf32> to vector<16x128xf32>
    %8 = vector.extract_strided_slice %6 {offsets = [0, 128], sizes = [16, 128], strides = [1, 1]} : vector<16x256xf32> to vector<16x128xf32>
    %cst_6 = arith.constant dense<0xFF800000> : vector<16xf32>
    %9 = vector.multi_reduction <maximumf>, %7, %cst_6 [1] : vector<16x128xf32> to vector<16xf32>
    %10 = vector.shape_cast %9 : vector<16xf32> to vector<16x1xf32>
    %11 = vector.broadcast %10 : vector<16x1xf32> to vector<16x128xf32>
    %12 = arith.subf %7, %11 : vector<16x128xf32>
    %13 = math.exp %12 : vector<16x128xf32>
    %cst_7 = arith.constant dense<0.000000e+00> : vector<16xf32>
    %14 = vector.multi_reduction <add>, %13, %cst_7 [1] : vector<16x128xf32> to vector<16xf32>
    %15 = vector.shape_cast %14 : vector<16xf32> to vector<16x1xf32>
    %cst_8 = arith.constant dense<0xFF800000> : vector<16xf32>
    %16 = vector.multi_reduction <maximumf>, %8, %cst_8 [1] : vector<16x128xf32> to vector<16xf32>
    %17 = vector.shape_cast %16 : vector<16xf32> to vector<16x1xf32>
    %18 = vector.broadcast %17 : vector<16x1xf32> to vector<16x128xf32>
    %19 = arith.subf %8, %18 : vector<16x128xf32>
    %20 = math.exp %19 : vector<16x128xf32>
    %cst_9 = arith.constant dense<0.000000e+00> : vector<16xf32>
    %21 = vector.multi_reduction <add>, %20, %cst_9 [1] : vector<16x128xf32> to vector<16xf32>
    %22 = vector.shape_cast %21 : vector<16xf32> to vector<16x1xf32>
    %23 = math.log %22 : vector<16x1xf32>
    %24 = arith.addf %23, %17 : vector<16x1xf32>
    %25 = vector.broadcast %24 : vector<16x1xf32> to vector<16x128xf32>
    %26 = arith.subf %8, %25 : vector<16x128xf32>
    %c0_10 = arith.constant 0 : index
    %c0_11 = arith.constant 0 : index
    %c0_12 = arith.constant 0 : index
    %27 = vector.load %arg12[%c0_10, %c0_11, %c0_12] : memref<1x16x128xf32, #tpu.memory_space<vmem>>, vector<1x16x128xf32>
    %28 = vector.shape_cast %27 : vector<1x16x128xf32> to vector<16x128xf32>
    %29 = vector.shape_cast %26 : vector<16x128xf32> to vector<1x16x128xf32>
    tpu.vector_store %arg12[%c0_10, %c0_11, %c0_12], %29 {strides = array<i32>} : memref<1x16x128xf32, #tpu.memory_space<vmem>>, vector<1x16x128xf32>,
    %30 = math.exp %26 : vector<16x128xf32>
    %31 = vector.extract_strided_slice %30 {offsets = [0, 0], sizes = [16, 1], strides = [1, 1]} : vector<16x128xf32> to vector<16x1xf32>
    %32 = tpu.reciprocal %15 {approx = true} : vector<16x1xf32> -> vector<16x1xf32>
    %33 = arith.mulf %31, %32 : vector<16x1xf32>
    %34 = vector.broadcast %33 : vector<16x1xf32> to vector<16x128xf32>
    %35 = arith.mulf %13, %34 : vector<16x128xf32>
    %c0_13 = arith.constant 0 : index
    %c0_14 = arith.constant 0 : index
    %c0_15 = arith.constant 0 : index
    %36 = vector.load %arg9[%c0_13, %c0_14, %c0_15] : memref<1x16x128xf32, #tpu.memory_space<vmem>>, vector<1x16x128xf32>
    %37 = vector.shape_cast %36 : vector<1x16x128xf32> to vector<16x128xf32>
    %38 = vector.shape_cast %35 : vector<16x128xf32> to vector<1x16x128xf32>
    tpu.vector_store %arg9[%c0_13, %c0_14, %c0_15], %38 {strides = array<i32>} : memref<1x16x128xf32, #tpu.memory_space<vmem>>, vector<1x16x128xf32>,
    %c0_16 = arith.constant 0 : index
    %c0_17 = arith.constant 0 : index
    %c0_18 = arith.constant 0 : index
    %39 = vector.load %arg3[%c0_16, %c0_17, %c0_18] : memref<1x16x8xf32, #tpu.memory_space<vmem>>, vector<1x16x8xf32>
    %40 = vector.shape_cast %39 : vector<1x16x8xf32> to vector<16x8xf32>
    %41 = vector.extract_strided_slice %30 {offsets = [0, 1], sizes = [16, 1], strides = [1, 1]} : vector<16x128xf32> to vector<16x1xf32>
    %42 = vector.broadcast %41 : vector<16x1xf32> to vector<16x8xf32>
    %43 = arith.mulf %40, %42 : vector<16x8xf32>
    %c0_19 = arith.constant 0 : index
    %c0_20 = arith.constant 0 : index
    %c0_21 = arith.constant 0 : index
    %44 = vector.load %arg4[%c0_19, %c0_20, %c0_21] : memref<1x16x8xf32, #tpu.memory_space<vmem>>, vector<1x16x8xf32>
    %45 = vector.shape_cast %44 : vector<1x16x8xf32> to vector<16x8xf32>
    %46 = vector.extract_strided_slice %30 {offsets = [0, 2], sizes = [16, 1], strides = [1, 1]} : vector<16x128xf32> to vector<16x1xf32>
    %47 = vector.broadcast %46 : vector<16x1xf32> to vector<16x8xf32>
    %48 = arith.mulf %45, %47 : vector<16x8xf32>
    %c0_22 = arith.constant 0 : index
    %c0_23 = arith.constant 0 : index
    %c0_24 = arith.constant 0 : index
    %49 = vector.load %arg7[%c0_22, %c0_23, %c0_24] : memref<1x8x128xf32, #tpu.memory_space<vmem>>, vector<1x8x128xf32>
    %50 = vector.shape_cast %49 : vector<1x8x128xf32> to vector<8x128xf32>
    %cst_25 = arith.constant dense<0.000000e+00> : vector<16x128xf32>
    %51 = tpu.matmul %43, %50, %cst_25 {dimension_numbers = #tpu.dot_dimension_numbers<[1], [0], [0], [1], [0, 0, 1, 1], [], []>} : vector<16x8xf32>, vector<8x128xf32>, vector<16x128xf32> -> vector<16x128xf32>
    %c0_26 = arith.constant 0 : index
    %c0_27 = arith.constant 0 : index
    %c0_28 = arith.constant 0 : index
    %52 = vector.load %arg10[%c0_26, %c0_27, %c0_28] : memref<1x16x128xf32, #tpu.memory_space<vmem>>, vector<1x16x128xf32>
    %53 = vector.shape_cast %52 : vector<1x16x128xf32> to vector<16x128xf32>
    %54 = vector.shape_cast %51 : vector<16x128xf32> to vector<1x16x128xf32>
    tpu.vector_store %arg10[%c0_26, %c0_27, %c0_28], %54 {strides = array<i32>} : memref<1x16x128xf32, #tpu.memory_space<vmem>>, vector<1x16x128xf32>,
    %c0_29 = arith.constant 0 : index
    %c0_30 = arith.constant 0 : index
    %c0_31 = arith.constant 0 : index
    %55 = vector.load %arg8[%c0_29, %c0_30, %c0_31] : memref<1x8x128xf32, #tpu.memory_space<vmem>>, vector<1x8x128xf32>
    %56 = vector.shape_cast %55 : vector<1x8x128xf32> to vector<8x128xf32>
    %cst_32 = arith.constant dense<0.000000e+00> : vector<16x128xf32>
    %57 = tpu.matmul %48, %56, %cst_32 {dimension_numbers = #tpu.dot_dimension_numbers<[1], [0], [0], [1], [0, 0, 1, 1], [], []>} : vector<16x8xf32>, vector<8x128xf32>, vector<16x128xf32> -> vector<16x128xf32>
    %c0_33 = arith.constant 0 : index
    %c0_34 = arith.constant 0 : index
    %c0_35 = arith.constant 0 : index
    %58 = vector.load %arg11[%c0_33, %c0_34, %c0_35] : memref<1x16x128xf32, #tpu.memory_space<vmem>>, vector<1x16x128xf32>
    %59 = vector.shape_cast %58 : vector<1x16x128xf32> to vector<16x128xf32>
    %60 = vector.shape_cast %57 : vector<16x128xf32> to vector<1x16x128xf32>
    tpu.vector_store %arg11[%c0_33, %c0_34, %c0_35], %60 {strides = array<i32>} : memref<1x16x128xf32, #tpu.memory_space<vmem>>, vector<1x16x128xf32>,
    return
  }
  func.func @transform_0(%arg0: i32, %arg1: i32) -> (i32, i32, i32) {
    %c0_i32 = arith.constant 0 : i32
    %c0_i32_0 = arith.constant 0 : i32
    return %arg0, %arg1, %c0_i32 : i32, i32, i32
  }
  func.func @transform_1(%arg0: i32, %arg1: i32) -> (i32, i32, i32) {
    %c0_i32 = arith.constant 0 : i32
    %c0_i32_0 = arith.constant 0 : i32
    return %arg0, %arg1, %c0_i32 : i32, i32, i32
  }
  func.func @transform_2(%arg0: i32, %arg1: i32) -> (i32, i32, i32) {
    %c0_i32 = arith.constant 0 : i32
    %c0_i32_0 = arith.constant 0 : i32
    return %arg0, %arg1, %c0_i32 : i32, i32, i32
  }
  func.func @transform_3(%arg0: i32, %arg1: i32) -> (i32, i32) {
    %c0_i32 = arith.constant 0 : i32
    %c0_i32_0 = arith.constant 0 : i32
    %c0_i32_1 = arith.constant 0 : i32
    return %c0_i32, %c0_i32_0 : i32, i32
  }
  func.func @transform_4(%arg0: i32, %arg1: i32) -> (i32, i32) {
    %c0_i32 = arith.constant 0 : i32
    %c0_i32_0 = arith.constant 0 : i32
    %c0_i32_1 = arith.constant 0 : i32
    return %c0_i32, %c0_i32_0 : i32, i32
  }
  func.func @transform_5(%arg0: i32, %arg1: i32) -> (i32, i32, i32) {
    %c0_i32 = arith.constant 0 : i32
    %c0_i32_0 = arith.constant 0 : i32
    %c0_i32_1 = arith.constant 0 : i32
    return %arg0, %c0_i32, %c0_i32_0 : i32, i32, i32
  }
  func.func @transform_6(%arg0: i32, %arg1: i32) -> (i32, i32, i32) {
    %c0_i32 = arith.constant 0 : i32
    %c0_i32_0 = arith.constant 0 : i32
    %c0_i32_1 = arith.constant 0 : i32
    return %arg0, %c0_i32, %c0_i32_0 : i32, i32, i32
  }
  func.func @transform_7(%arg0: i32, %arg1: i32) -> (i32, i32, i32) {
    %c0_i32 = arith.constant 0 : i32
    %c0_i32_0 = arith.constant 0 : i32
    return %arg0, %arg1, %c0_i32 : i32, i32, i32
  }
  func.func @transform_8(%arg0: i32, %arg1: i32) -> (i32, i32, i32) {
    %c0_i32 = arith.constant 0 : i32
    %c0_i32_0 = arith.constant 0 : i32
    return %arg0, %arg1, %c0_i32 : i32, i32, i32
  }
  func.func @transform_9(%arg0: i32, %arg1: i32) -> (i32, i32, i32) {
    %c0_i32 = arith.constant 0 : i32
    %c0_i32_0 = arith.constant 0 : i32
    return %arg0, %arg1, %c0_i32 : i32, i32, i32
  }
  func.func @transform_10(%arg0: i32, %arg1: i32) -> (i32, i32, i32) {
    %c0_i32 = arith.constant 0 : i32
    %c0_i32_0 = arith.constant 0 : i32
    return %arg0, %arg1, %c0_i32 : i32, i32, i32
  }
}

module attributes {stable_mosaic.version = 11 : i64} {
  func.func @_copygen_kernel(%arg0: i32, %arg1: i32, %arg2: memref<1x16x32xbf16, #tpu.memory_space<vmem>>, %arg3: memref<1x16x8xf32, #tpu.memory_space<vmem>>, %arg4: memref<1x16x8xf32, #tpu.memory_space<vmem>>, %arg5: memref<32x256xbf16, #tpu.memory_space<vmem>>, %arg6: memref<1x256xf32, #tpu.memory_space<vmem>>, %arg7: memref<1x8x128xf32, #tpu.memory_space<vmem>>, %arg8: memref<1x8x128xf32, #tpu.memory_space<vmem>>, %arg9: memref<1x16x128xf32, #tpu.memory_space<vmem>>, %arg10: memref<1x16x128xf32, #tpu.memory_space<vmem>>, %arg11: memref<1x16x128xf32, #tpu.memory_space<vmem>>, %arg12: memref<1x16x128xf32, #tpu.memory_space<vmem>>) attributes {dimension_semantics = [#tpu.dimension_semantics<parallel>, #tpu.dimension_semantics<parallel>], iteration_bounds = array<i64: 2, 2>, scalar_prefetch = 0 : i64, scratch_operands = 0 : i64, tpu.core_type = #tpu.core_type<tc>, window_params = [{transform_indices = @transform_0, window_bounds = array<i64: 1, 16, 32>}, {transform_indices = @transform_1, window_bounds = array<i64: 1, 16, 8>}, {transform_indices = @transform_2, window_bounds = array<i64: 1, 16, 8>}, {pipeline_mode = #tpu.pipeline_mode<synchronous>, transform_indices = @transform_3, window_bounds = array<i64: 32, 256>}, {pipeline_mode = #tpu.pipeline_mode<synchronous>, transform_indices = @transform_4, window_bounds = array<i64: 1, 256>}, {transform_indices = @transform_5, window_bounds = array<i64: 1, 8, 128>}, {transform_indices = @transform_6, window_bounds = array<i64: 1, 8, 128>}, {transform_indices = @transform_7, window_bounds = array<i64: 1, 16, 128>}, {transform_indices = @transform_8, window_bounds = array<i64: 1, 16, 128>}, {transform_indices = @transform_9, window_bounds = array<i64: 1, 16, 128>}, {transform_indices = @transform_10, window_bounds = array<i64: 1, 16, 128>}]} {
    %c0 = arith.constant 0 : index
    %c0_0 = arith.constant 0 : index
    %c0_1 = arith.constant 0 : index
    %0 = vector.load %arg2[%c0, %c0_0, %c0_1] : memref<1x16x32xbf16, #tpu.memory_space<vmem>>, vector<1x16x32xbf16>
    %1 = vector.shape_cast %0 : vector<1x16x32xbf16> to vector<16x32xbf16>
    %c0_2 = arith.constant 0 : index
    %c0_3 = arith.constant 0 : index
    %2 = vector.load %arg5[%c0_2, %c0_3] : memref<32x256xbf16, #tpu.memory_space<vmem>>, vector<32x256xbf16>
    %cst = arith.constant dense<0.000000e+00> : vector<16x256xf32>
    %3 = tpu.matmul %1, %2, %cst {dimension_numbers = #tpu.dot_dimension_numbers<[1], [0], [0], [1], [0, 0, 1, 1], [], []>} : vector<16x32xbf16>, vector<32x256xbf16>, vector<16x256xf32> -> vector<16x256xf32>
    %c0_4 = arith.constant 0 : index
    %c0_5 = arith.constant 0 : index
    %4 = vector.load %arg6[%c0_4, %c0_5] : memref<1x256xf32, #tpu.memory_space<vmem>>, vector<1x256xf32>
    %5 = vector.broadcast %4 : vector<1x256xf32> to vector<16x256xf32>
    %6 = arith.addf %3, %5 : vector<16x256xf32>
    %7 = vector.extract_strided_slice %6 {offsets = [0, 0], sizes = [16, 128], strides = [1, 1]} : vector<16x256xf32> to vector<16x128xf32>
    %8 = vector.extract_strided_slice %6 {offsets = [0, 128], sizes = [16, 128], strides = [1, 1]} : vector<16x256xf32> to vector<16x128xf32>
    %cst_6 = arith.constant dense<0xFF800000> : vector<16xf32>
    %9 = vector.multi_reduction <maximumf>, %7, %cst_6 [1] : vector<16x128xf32> to vector<16xf32>
    %10 = vector.shape_cast %9 : vector<16xf32> to vector<16x1xf32>
    %11 = vector.broadcast %10 : vector<16x1xf32> to vector<16x128xf32>
    %12 = arith.subf %7, %11 : vector<16x128xf32>
    %13 = math.exp %12 : vector<16x128xf32>
    %cst_7 = arith.constant dense<0.000000e+00> : vector<16xf32>
    %14 = vector.multi_reduction <add>, %13, %cst_7 [1] : vector<16x128xf32> to vector<16xf32>
    %15 = vector.shape_cast %14 : vector<16xf32> to vector<16x1xf32>
    %cst_8 = arith.constant dense<0xFF800000> : vector<16xf32>
    %16 = vector.multi_reduction <maximumf>, %8, %cst_8 [1] : vector<16x128xf32> to vector<16xf32>
    %17 = vector.shape_cast %16 : vector<16xf32> to vector<16x1xf32>
    %18 = vector.broadcast %17 : vector<16x1xf32> to vector<16x128xf32>
    %19 = arith.subf %8, %18 : vector<16x128xf32>
    %20 = math.exp %19 : vector<16x128xf32>
    %cst_9 = arith.constant dense<0.000000e+00> : vector<16xf32>
    %21 = vector.multi_reduction <add>, %20, %cst_9 [1] : vector<16x128xf32> to vector<16xf32>
    %22 = vector.shape_cast %21 : vector<16xf32> to vector<16x1xf32>
    %23 = math.log %22 : vector<16x1xf32>
    %24 = arith.addf %23, %17 : vector<16x1xf32>
    %25 = vector.broadcast %24 : vector<16x1xf32> to vector<16x128xf32>
    %26 = arith.subf %8, %25 : vector<16x128xf32>
    %c0_10 = arith.constant 0 : index
    %c0_11 = arith.constant 0 : index
    %c0_12 = arith.constant 0 : index
    %27 = vector.load %arg12[%c0_10, %c0_11, %c0_12] : memref<1x16x128xf32, #tpu.memory_space<vmem>>, vector<1x16x128xf32>
    %28 = vector.shape_cast %27 : vector<1x16x128xf32> to vector<16x128xf32>
    %29 = vector.shape_cast %26 : vector<16x128xf32> to vector<1x16x128xf32>
    tpu.vector_store %arg12[%c0_10, %c0_11, %c0_12], %29 {strides = array<i32>} : memref<1x16x128xf32, #tpu.memory_space<vmem>>, vector<1x16x128xf32>,
    %30 = math.exp %26 : vector<16x128xf32>
    %31 = vector.extract_strided_slice %30 {offsets = [0, 0], sizes = [16, 1], strides = [1, 1]} : vector<16x128xf32> to vector<16x1xf32>
    %32 = tpu.reciprocal %15 {approx = true} : vector<16x1xf32> -> vector<16x1xf32>
    %33 = arith.mulf %31, %32 : vector<16x1xf32>
    %34 = vector.broadcast %33 : vector<16x1xf32> to vector<16x128xf32>
    %35 = arith.mulf %13, %34 : vector<16x128xf32>
    %c0_13 = arith.constant 0 : index
    %c0_14 = arith.constant 0 : index
    %c0_15 = arith.constant 0 : index
    %36 = vector.load %arg9[%c0_13, %c0_14, %c0_15] : memref<1x16x128xf32, #tpu.memory_space<vmem>>, vector<1x16x128xf32>
    %37 = vector.shape_cast %36 : vector<1x16x128xf32> to vector<16x128xf32>
    %38 = vector.shape_cast %35 : vector<16x128xf32> to vector<1x16x128xf32>
    tpu.vector_store %arg9[%c0_13, %c0_14, %c0_15], %38 {strides = array<i32>} : memref<1x16x128xf32, #tpu.memory_space<vmem>>, vector<1x16x128xf32>,
    %c0_16 = arith.constant 0 : index
    %c0_17 = arith.constant 0 : index
    %c0_18 = arith.constant 0 : index
    %39 = vector.load %arg3[%c0_16, %c0_17, %c0_18] : memref<1x16x8xf32, #tpu.memory_space<vmem>>, vector<1x16x8xf32>
    %40 = vector.shape_cast %39 : vector<1x16x8xf32> to vector<16x8xf32>
    %41 = vector.extract_strided_slice %30 {offsets = [0, 1], sizes = [16, 1], strides = [1, 1]} : vector<16x128xf32> to vector<16x1xf32>
    %42 = vector.broadcast %41 : vector<16x1xf32> to vector<16x8xf32>
    %43 = arith.mulf %40, %42 : vector<16x8xf32>
    %c0_19 = arith.constant 0 : index
    %c0_20 = arith.constant 0 : index
    %c0_21 = arith.constant 0 : index
    %44 = vector.load %arg4[%c0_19, %c0_20, %c0_21] : memref<1x16x8xf32, #tpu.memory_space<vmem>>, vector<1x16x8xf32>
    %45 = vector.shape_cast %44 : vector<1x16x8xf32> to vector<16x8xf32>
    %46 = vector.extract_strided_slice %30 {offsets = [0, 2], sizes = [16, 1], strides = [1, 1]} : vector<16x128xf32> to vector<16x1xf32>
    %47 = vector.broadcast %46 : vector<16x1xf32> to vector<16x8xf32>
    %48 = arith.mulf %45, %47 : vector<16x8xf32>
    %c0_22 = arith.constant 0 : index
    %c0_23 = arith.constant 0 : index
    %c0_24 = arith.constant 0 : index
    %49 = vector.load %arg7[%c0_22, %c0_23, %c0_24] : memref<1x8x128xf32, #tpu.memory_space<vmem>>, vector<1x8x128xf32>
    %50 = vector.shape_cast %49 : vector<1x8x128xf32> to vector<8x128xf32>
    %cst_25 = arith.constant dense<0.000000e+00> : vector<16x128xf32>
    %51 = tpu.matmul %43, %50, %cst_25 {dimension_numbers = #tpu.dot_dimension_numbers<[1], [0], [0], [1], [0, 0, 1, 1], [], []>} : vector<16x8xf32>, vector<8x128xf32>, vector<16x128xf32> -> vector<16x128xf32>
    %c0_26 = arith.constant 0 : index
    %c0_27 = arith.constant 0 : index
    %c0_28 = arith.constant 0 : index
    %52 = vector.load %arg10[%c0_26, %c0_27, %c0_28] : memref<1x16x128xf32, #tpu.memory_space<vmem>>, vector<1x16x128xf32>
    %53 = vector.shape_cast %52 : vector<1x16x128xf32> to vector<16x128xf32>
    %54 = vector.shape_cast %51 : vector<16x128xf32> to vector<1x16x128xf32>
    tpu.vector_store %arg10[%c0_26, %c0_27, %c0_28], %54 {strides = array<i32>} : memref<1x16x128xf32, #tpu.memory_space<vmem>>, vector<1x16x128xf32>,
    %c0_29 = arith.constant 0 : index
    %c0_30 = arith.constant 0 : index
    %c0_31 = arith.constant 0 : index
    %55 = vector.load %arg8[%c0_29, %c0_30, %c0_31] : memref<1x8x128xf32, #tpu.memory_space<vmem>>, vector<1x8x128xf32>
    %56 = vector.shape_cast %55 : vector<1x8x128xf32> to vector<8x128xf32>
    %cst_32 = arith.constant dense<0.000000e+00> : vector<16x128xf32>
    %57 = tpu.matmul %48, %56, %cst_32 {dimension_numbers = #tpu.dot_dimension_numbers<[1], [0], [0], [1], [0, 0, 1, 1], [], []>} : vector<16x8xf32>, vector<8x128xf32>, vector<16x128xf32> -> vector<16x128xf32>
    %c0_33 = arith.constant 0 : index
    %c0_34 = arith.constant 0 : index
    %c0_35 = arith.constant 0 : index
    %58 = vector.load %arg11[%c0_33, %c0_34, %c0_35] : memref<1x16x128xf32, #tpu.memory_space<vmem>>, vector<1x16x128xf32>
    %59 = vector.shape_cast %58 : vector<1x16x128xf32> to vector<16x128xf32>
    %60 = vector.shape_cast %57 : vector<16x128xf32> to vector<1x16x128xf32>
    tpu.vector_store %arg11[%c0_33, %c0_34, %c0_35], %60 {strides = array<i32>} : memref<1x16x128xf32, #tpu.memory_space<vmem>>, vector<1x16x128xf32>,
    return
  }
  func.func @transform_0(%arg0: i32, %arg1: i32) -> (i32, i32, i32) {
    %c0_i32 = arith.constant 0 : i32
    %c0_i32_0 = arith.constant 0 : i32
    return %arg0, %arg1, %c0_i32 : i32, i32, i32
  }
  func.func @transform_1(%arg0: i32, %arg1: i32) -> (i32, i32, i32) {
    %c0_i32 = arith.constant 0 : i32
    %c0_i32_0 = arith.constant 0 : i32
    return %arg0, %arg1, %c0_i32 : i32, i32, i32
  }
  func.func @transform_2(%arg0: i32, %arg1: i32) -> (i32, i32, i32) {
    %c0_i32 = arith.constant 0 : i32
    %c0_i32_0 = arith.constant 0 : i32
    return %arg0, %arg1, %c0_i32 : i32, i32, i32
  }
  func.func @transform_3(%arg0: i32, %arg1: i32) -> (i32, i32) {
    %c0_i32 = arith.constant 0 : i32
    %c0_i32_0 = arith.constant 0 : i32
    %c0_i32_1 = arith.constant 0 : i32
    return %c0_i32, %c0_i32_0 : i32, i32
  }
  func.func @transform_4(%arg0: i32, %arg1: i32) -> (i32, i32) {
    %c0_i32 = arith.constant 0 : i32
    %c0_i32_0 = arith.constant 0 : i32
    %c0_i32_1 = arith.constant 0 : i32
    return %c0_i32, %c0_i32_0 : i32, i32
  }
  func.func @transform_5(%arg0: i32, %arg1: i32) -> (i32, i32, i32) {
    %c0_i32 = arith.constant 0 : i32
    %c0_i32_0 = arith.constant 0 : i32
    %c0_i32_1 = arith.constant 0 : i32
    return %arg0, %c0_i32, %c0_i32_0 : i32, i32, i32
  }
  func.func @transform_6(%arg0: i32, %arg1: i32) -> (i32, i32, i32) {
    %c0_i32 = arith.constant 0 : i32
    %c0_i32_0 = arith.constant 0 : i32
    %c0_i32_1 = arith.constant 0 : i32
    return %arg0, %c0_i32, %c0_i32_0 : i32, i32, i32
  }
  func.func @transform_7(%arg0: i32, %arg1: i32) -> (i32, i32, i32) {
    %c0_i32 = arith.constant 0 : i32
    %c0_i32_0 = arith.constant 0 : i32
    return %arg0, %arg1, %c0_i32 : i32, i32, i32
  }
  func.func @transform_8(%arg0: i32, %arg1: i32) -> (i32, i32, i32) {
    %c0_i32 = arith.constant 0 : i32
    %c0_i32_0 = arith.constant 0 : i32
    return %arg0, %arg1, %c0_i32 : i32, i32, i32
  }
  func.func @transform_9(%arg0: i32, %arg1: i32) -> (i32, i32, i32) {
    %c0_i32 = arith.constant 0 : i32
    %c0_i32_0 = arith.constant 0 : i32
    return %arg0, %arg1, %c0_i32 : i32, i32, i32
  }
  func.func @transform_10(%arg0: i32, %arg1: i32) -> (i32, i32, i32) {
    %c0_i32 = arith.constant 0 : i32
    %c0_i32_0 = arith.constant 0 : i32
    return %arg0, %arg1, %c0_i32 : i32, i32, i32
  }
}

</mosaic_0001>

<llo_original>
// kernel: tpu_custom_call.1
$region0: #{tpu_custom_call.1}
  #allocation0 [shape = 'u32[]', space=smem, size = 0x4, offset = 0x4, fixed_abs, tag = 'smem constant byte address 0x4 - core index']
  #allocation1 [shape = 'u32[144,128]{1,0:T(1,128)}', space=vmem, size = 0x12000, scoped, tag = 'internal scratch']
  %s0 = inlined_call_operand.hbm [shape: bf16[2,32,32], index: 0, kind: input, shape index: {}]
  %s1 = inlined_call_operand.hbm [shape: f32[2,32,8], index: 1, kind: input, shape index: {}]
  %s2 = inlined_call_operand.hbm [shape: f32[2,32,8], index: 2, kind: input, shape index: {}]
  %s3 = inlined_call_operand.hbm [shape: bf16[32,256], index: 3, kind: input, shape index: {}]
  %s4 = inlined_call_operand.hbm [shape: f32[1,256], index: 4, kind: input, shape index: {}]
  %s5 = inlined_call_operand.hbm [shape: f32[2,8,128], index: 5, kind: input, shape index: {}]
  %s6 = inlined_call_operand.hbm [shape: f32[2,8,128], index: 6, kind: input, shape index: {}]
  %s7 = inlined_call_operand.hbm [shape: f32[2,32,128], index: 7, kind: output, shape index: {0}]
  %s8 = inlined_call_operand.hbm [shape: f32[2,32,128], index: 8, kind: output, shape index: {1}]
  %s9 = inlined_call_operand.hbm [shape: f32[2,32,128], index: 9, kind: output, shape index: {2}]
  %s10 = inlined_call_operand.hbm [shape: f32[2,32,128], index: 10, kind: output, shape index: {3}]
  %11 = xla_tuple %s7, %s8, %s9, %s10
  %s12 = sld [smem:[#allocation0]]
  $region113: #{tpu_custom_call.1} parent=0
    _
  %s14 = ssub.s32 1, %s12
  %s15 = scalar_select 0, %s14, %s12
  $region1: #{tpu_custom_call.1} parent=0
    #allocation2 [shape = 'u8[8192]{0}', space=vmem, size = 0x2000, scoped, tag = 'input window, operand 0']
    #allocation3 [shape = 's32[2]{0}', space=sflag, size = 0x8, scoped, tag = 'scoped memory for tpu_custom_call.1']
    #allocation4 [shape = 's32[2]{0}', space=sflag, size = 0x8, scoped, tag = 'scoped memory for tpu_custom_call.1']
    #allocation5 [shape = 'u8[16384]{0}', space=vmem, size = 0x4000, scoped, tag = 'input window, operand 1']
    #allocation6 [shape = 's32[2]{0}', space=sflag, size = 0x8, scoped, tag = 'scoped memory for tpu_custom_call.1']
    #allocation7 [shape = 'u8[16384]{0}', space=vmem, size = 0x4000, scoped, tag = 'input window, operand 2']
    #allocation8 [shape = 'u8[16384]{0}', space=vmem, size = 0x4000, scoped, tag = 'input window, operand 3, single buffered']
    #allocation9 [shape = 's32[1]{0}', space=sflag, size = 0x4, scoped, tag = 'scoped memory for tpu_custom_call.1']
    #allocation10 [shape = 'u8[1024]{0}', space=vmem, size = 0x400, scoped, tag = 'input window, operand 4, single buffered']
    #allocation11 [shape = 'u8[8192]{0}', space=vmem, size = 0x2000, scoped, tag = 'input window, operand 5']
    #allocation12 [shape = 's32[2]{0}', space=sflag, size = 0x8, scoped, tag = 'scoped memory for tpu_custom_call.1']
    #allocation13 [shape = 'u8[8192]{0}', space=vmem, size = 0x2000, scoped, tag = 'input window, operand 6']
    #allocation14 [shape = 'u8[16384]{0}', space=vmem, size = 0x4000, scoped, tag = 'output window, operand 0']
    #allocation15 [shape = 'u8[16384]{0}', space=vmem, size = 0x4000, scoped, tag = 'output window, operand 1']
    #allocation16 [shape = 's32[2]{0}', space=sflag, size = 0x8, scoped, tag = 'scoped memory for tpu_custom_call.1']
    #allocation17 [shape = 'u8[16384]{0}', space=vmem, size = 0x4000, scoped, tag = 'output window, operand 2']
    #allocation18 [shape = 'u8[16384]{0}', space=vmem, size = 0x4000, scoped, tag = 'output window, operand 3']
    #allocation19 [shape = 's32[2]{0}', space=sflag, size = 0x8, scoped, tag = 'scoped memory for tpu_custom_call.1']
    %16 = vsyncpa [#allocation3], 0
    %s17 = scalar_lea.sflag [#allocation3], 1
    %18 = vsyncpa %s17, 0
    %19 = vsyncpa [#allocation6], 0
    %s20 = scalar_lea.sflag [#allocation6], 1
    %21 = vsyncpa %s20, 0
    %22 = vsyncpa [#allocation9], 0
    %23 = vsyncpa [#allocation12], 0
    %s24 = scalar_lea.sflag [#allocation12], 1
    %25 = vsyncpa %s24, 0
    %26 = vsyncpa [#allocation4], 0
    %s27 = scalar_lea.sflag [#allocation4], 1
    %28 = vsyncpa %s27, 0
    %29 = vsyncpa [#allocation16], 0
    %s30 = scalar_lea.sflag [#allocation16], 1
    %31 = vsyncpa %s30, 0
    %32 = vsyncpa [#allocation19], 0
    %s33 = scalar_lea.sflag [#allocation19], 1
    %34 = vsyncpa %s33, 0
    loop: start=0, step=1, limit=6
    $region2: #{tpu_custom_call.1} parent=1 // loop_pre_header
      _
    $region3: #{tpu_custom_call.1} parent=1 // loop_header
      %s36 = sphi 0, %s40
      %p37 = scmp.ge.s32.totalorder %s36, 6
      %s43 = sphi 0, %s55
      %s44 = sphi 0, %s51
      %s45 = sphi 0, %s43
      %s46 = sphi 0, %s44
      %s47 = sphi 0, %s45
      %s48 = sphi 0, %s46
      %s60 = sphi 0, %s62
      %s63 = sphi 0, %s60
      %s64 = sphi 0, %s63
      %s80 = sphi 0, %s64
      %s88 = sphi 0, %s90
      %s91 = sphi 0, %s88
      %s92 = sphi 0, %s91
      %s108 = sphi 0, %s92
      %s116 = sphi 0, %s118
      %s119 = sphi 0, %s116
      %s120 = sphi 0, %s119
      %s136 = sphi 0, %s120
      %s140 = sphi 0, %s140
      %s142 = sphi 0, %s140
      %s143 = sphi 0, %s142
      %s157 = sphi 0, %s143
      %s161 = sphi 0, %s161
      %s163 = sphi 0, %s161
      %s164 = sphi 0, %s163
      %s178 = sphi 0, %s164
      %s184 = sphi 0, %s186
      %s187 = sphi 0, %s184
      %s188 = sphi 0, %s187
      %s204 = sphi 0, %s188
      %s210 = sphi 0, %s212
      %s213 = sphi 0, %s210
      %s214 = sphi 0, %s213
      %s230 = sphi 0, %s214
      %s238 = sphi 0, %s240
      %s241 = sphi 0, %s238
      %s242 = sphi 0, %s241
      %s258 = sphi 0, %s242
      %s266 = sphi 0, %s268
      %s269 = sphi 0, %s266
      %s270 = sphi 0, %s269
      %s286 = sphi 0, %s270
      %s294 = sphi 0, %s296
      %s297 = sphi 0, %s294
      %s298 = sphi 0, %s297
      %s314 = sphi 0, %s298
      %s322 = sphi 0, %s324
      %s325 = sphi 0, %s322
      %s326 = sphi 0, %s325
      %s342 = sphi 0, %s326
    $region4: #{tpu_custom_call.1} parent=1 // loop_header_branch
      %39 = sbr.rel (%p37) target = $region8
    $region5: #{tpu_custom_call.1} parent=1 // loop_body
      %s41 = ssub.s32 %s36, 1
      %s42 = ssub.s32 %s36, 2
      %s49 = sadd.s32 1, %s44
      %p50 = scmp.ge.s32.totalorder %s49, 2
      %s51 = scalar_select %p50, 0, %s49
      %s52 = sadd.s32 1, %s43
      %s53 = scalar_select %p50, %s52, %s43
      %p54 = scmp.ge.s32.totalorder %s53, 2
      %s55 = scalar_select %p54, 0, %s53
      %s56 = ssub.s32 %s43, %s55
      %s57 = ssub.s32 %s44, %s51
      %s58 = sor.u32 %s56, %s57
      %p59 = scmp.eq.s32.totalorder %s58, 0
      %s61 = sadd.s32 %s60, 1
      %s62 = scalar_select %p59, %s60, %s61
      %p65 = pneg %p59
      %p66 = scmp.eq.s32.totalorder %s36, 3
      %p67 = por %p65, %p66
      %p68 = scmp.ne.s32.totalorder %s60, %s63
      %p69 = scmp.eq.s32.totalorder %s36, 0
      %p70 = por %p68, %p69
      %p71 = scmp.ne.s32.totalorder %s60, %s63
      %p72 = scmp.eq.s32.totalorder %s41, 3
      %p73 = por %p71, %p72
      %p74 = scmp.ne.s32.totalorder %s63, %s64
      %p75 = scmp.eq.s32.totalorder %s41, 0
      %p76 = por %p74, %p75
      %p77 = scmp.ne.s32.totalorder %s63, %s64
      %p78 = scmp.eq.s32.totalorder %s42, 3
      %p79 = por %p77, %p78
      %p81 = scmp.ne.s32.totalorder %s64, %s80
      %p82 = scmp.eq.s32.totalorder %s42, 0
      %p83 = por %p81, %p82
      %s84 = ssub.s32 %s43, %s55
      %s85 = ssub.s32 %s44, %s51
      %s86 = sor.u32 %s84, %s85
      %p87 = scmp.eq.s32.totalorder %s86, 0
      %s89 = sadd.s32 %s88, 1
      %s90 = scalar_select %p87, %s88, %s89
      %p93 = pneg %p87
      %p94 = scmp.eq.s32.totalorder %s36, 3
      %p95 = por %p93, %p94
      %p96 = scmp.ne.s32.totalorder %s88, %s91
      %p97 = scmp.eq.s32.totalorder %s36, 0
      %p98 = por %p96, %p97
      %p99 = scmp.ne.s32.totalorder %s88, %s91
      %p100 = scmp.eq.s32.totalorder %s41, 3
      %p101 = por %p99, %p100
      %p102 = scmp.ne.s32.totalorder %s91, %s92
      %p103 = scmp.eq.s32.totalorder %s41, 0
      %p104 = por %p102, %p103
      %p105 = scmp.ne.s32.totalorder %s91, %s92
      %p106 = scmp.eq.s32.totalorder %s42, 3
      %p107 = por %p105, %p106
      %p109 = scmp.ne.s32.totalorder %s92, %s108
      %p110 = scmp.eq.s32.totalorder %s42, 0
      %p111 = por %p109, %p110
      %s112 = ssub.s32 %s43, %s55
      %s113 = ssub.s32 %s44, %s51
      %s114 = sor.u32 %s112, %s113
      %p115 = scmp.eq.s32.totalorder %s114, 0
      %s117 = sadd.s32 %s116, 1
      %s118 = scalar_select %p115, %s116, %s117
      %p121 = pneg %p115
      %p122 = scmp.eq.s32.totalorder %s36, 3
      %p123 = por %p121, %p122
      %p124 = scmp.ne.s32.totalorder %s116, %s119
      %p125 = scmp.eq.s32.totalorder %s36, 0
      %p126 = por %p124, %p125
      %p127 = scmp.ne.s32.totalorder %s116, %s119
      %p128 = scmp.eq.s32.totalorder %s41, 3
      %p129 = por %p127, %p128
      %p130 = scmp.ne.s32.totalorder %s119, %s120
      %p131 = scmp.eq.s32.totalorder %s41, 0
      %p132 = por %p130, %p131
      %p133 = scmp.ne.s32.totalorder %s119, %s120
      %p134 = scmp.eq.s32.totalorder %s42, 3
      %p135 = por %p133, %p134
      %p137 = scmp.ne.s32.totalorder %s120, %s136
      %p138 = scmp.eq.s32.totalorder %s42, 0
      %p139 = por %p137, %p138
      %s141 = sadd.s32 %s140, 1
      %p144 = scmp.eq.s32.totalorder %s36, 3
      %p145 = scmp.ne.s32.totalorder %s140, %s142
      %p146 = scmp.eq.s32.totalorder %s36, 0
      %p147 = por %p145, %p146
      %p148 = scmp.ne.s32.totalorder %s140, %s142
      %p149 = scmp.eq.s32.totalorder %s41, 3
      %p150 = por %p148, %p149
      %p151 = scmp.ne.s32.totalorder %s142, %s143
      %p152 = scmp.eq.s32.totalorder %s41, 0
      %p153 = por %p151, %p152
      %p154 = scmp.ne.s32.totalorder %s142, %s143
      %p155 = scmp.eq.s32.totalorder %s42, 3
      %p156 = por %p154, %p155
      %p158 = scmp.ne.s32.totalorder %s143, %s157
      %p159 = scmp.eq.s32.totalorder %s42, 0
      %p160 = por %p158, %p159
      %s162 = sadd.s32 %s161, 1
      %p165 = scmp.eq.s32.totalorder %s36, 3
      %p166 = scmp.ne.s32.totalorder %s161, %s163
      %p167 = scmp.eq.s32.totalorder %s36, 0
      %p168 = por %p166, %p167
      %p169 = scmp.ne.s32.totalorder %s161, %s163
      %p170 = scmp.eq.s32.totalorder %s41, 3
      %p171 = por %p169, %p170
      %p172 = scmp.ne.s32.totalorder %s163, %s164
      %p173 = scmp.eq.s32.totalorder %s41, 0
      %p174 = por %p172, %p173
      %p175 = scmp.ne.s32.totalorder %s163, %s164
      %p176 = scmp.eq.s32.totalorder %s42, 3
      %p177 = por %p175, %p176
      %p179 = scmp.ne.s32.totalorder %s164, %s178
      %p180 = scmp.eq.s32.totalorder %s42, 0
      %p181 = por %p179, %p180
      %s182 = ssub.s32 %s43, %s55
      %p183 = scmp.eq.s32.totalorder %s182, 0
      %s185 = sadd.s32 %s184, 1
      %s186 = scalar_select %p183, %s184, %s185
      %p189 = pneg %p183
      %p190 = scmp.eq.s32.totalorder %s36, 3
      %p191 = por %p189, %p190
      %p192 = scmp.ne.s32.totalorder %s184, %s187
      %p193 = scmp.eq.s32.totalorder %s36, 0
      %p194 = por %p192, %p193
      %p195 = scmp.ne.s32.totalorder %s184, %s187
      %p196 = scmp.eq.s32.totalorder %s41, 3
      %p197 = por %p195, %p196
      %p198 = scmp.ne.s32.totalorder %s187, %s188
      %p199 = scmp.eq.s32.totalorder %s41, 0
      %p200 = por %p198, %p199
      %p201 = scmp.ne.s32.totalorder %s187, %s188
      %p202 = scmp.eq.s32.totalorder %s42, 3
      %p203 = por %p201, %p202
      %p205 = scmp.ne.s32.totalorder %s188, %s204
      %p206 = scmp.eq.s32.totalorder %s42, 0
      %p207 = por %p205, %p206
      %s208 = ssub.s32 %s43, %s55
      %p209 = scmp.eq.s32.totalorder %s208, 0
      %s211 = sadd.s32 %s210, 1
      %s212 = scalar_select %p209, %s210, %s211
      %p215 = pneg %p209
      %p216 = scmp.eq.s32.totalorder %s36, 3
      %p217 = por %p215, %p216
      %p218 = scmp.ne.s32.totalorder %s210, %s213
      %p219 = scmp.eq.s32.totalorder %s36, 0
      %p220 = por %p218, %p219
      %p221 = scmp.ne.s32.totalorder %s210, %s213
      %p222 = scmp.eq.s32.totalorder %s41, 3
      %p223 = por %p221, %p222
      %p224 = scmp.ne.s32.totalorder %s213, %s214
      %p225 = scmp.eq.s32.totalorder %s41, 0
      %p226 = por %p224, %p225
      %p227 = scmp.ne.s32.totalorder %s213, %s214
      %p228 = scmp.eq.s32.totalorder %s42, 3
      %p229 = por %p227, %p228
      %p231 = scmp.ne.s32.totalorder %s214, %s230
      %p232 = scmp.eq.s32.totalorder %s42, 0
      %p233 = por %p231, %p232
      %s234 = ssub.s32 %s43, %s55
      %s235 = ssub.s32 %s44, %s51
      %s236 = sor.u32 %s234, %s235
      %p237 = scmp.eq.s32.totalorder %s236, 0
      %s239 = sadd.s32 %s238, 1
      %s240 = scalar_select %p237, %s238, %s239
      %p243 = pneg %p237
      %p244 = scmp.eq.s32.totalorder %s36, 3
      %p245 = por %p243, %p244
      %p246 = scmp.ne.s32.totalorder %s238, %s241
      %p247 = scmp.eq.s32.totalorder %s36, 0
      %p248 = por %p246, %p247
      %p249 = scmp.ne.s32.totalorder %s238, %s241
      %p250 = scmp.eq.s32.totalorder %s41, 3
      %p251 = por %p249, %p250
      %p252 = scmp.ne.s32.totalorder %s241, %s242
      %p253 = scmp.eq.s32.totalorder %s41, 0
      %p254 = por %p252, %p253
      %p255 = scmp.ne.s32.totalorder %s241, %s242
      %p256 = scmp.eq.s32.totalorder %s42, 3
      %p257 = por %p255, %p256
      %p259 = scmp.ne.s32.totalorder %s242, %s258
      %p260 = scmp.eq.s32.totalorder %s42, 0
      %p261 = por %p259, %p260
      %s262 = ssub.s32 %s43, %s55
      %s263 = ssub.s32 %s44, %s51
      %s264 = sor.u32 %s262, %s263
      %p265 = scmp.eq.s32.totalorder %s264, 0
      %s267 = sadd.s32 %s266, 1
      %s268 = scalar_select %p265, %s266, %s267
      %p271 = pneg %p265
      %p272 = scmp.eq.s32.totalorder %s36, 3
      %p273 = por %p271, %p272
      %p274 = scmp.ne.s32.totalorder %s266, %s269
      %p275 = scmp.eq.s32.totalorder %s36, 0
      %p276 = por %p274, %p275
      %p277 = scmp.ne.s32.totalorder %s266, %s269
      %p278 = scmp.eq.s32.totalorder %s41, 3
      %p279 = por %p277, %p278
      %p280 = scmp.ne.s32.totalorder %s269, %s270
      %p281 = scmp.eq.s32.totalorder %s41, 0
      %p282 = por %p280, %p281
      %p283 = scmp.ne.s32.totalorder %s269, %s270
      %p284 = scmp.eq.s32.totalorder %s42, 3
      %p285 = por %p283, %p284
      %p287 = scmp.ne.s32.totalorder %s270, %s286
      %p288 = scmp.eq.s32.totalorder %s42, 0
      %p289 = por %p287, %p288
      %s290 = ssub.s32 %s43, %s55
      %s291 = ssub.s32 %s44, %s51
      %s292 = sor.u32 %s290, %s291
      %p293 = scmp.eq.s32.totalorder %s292, 0
      %s295 = sadd.s32 %s294, 1
      %s296 = scalar_select %p293, %s294, %s295
      %p299 = pneg %p293
      %p300 = scmp.eq.s32.totalorder %s36, 3
      %p301 = por %p299, %p300
      %p302 = scmp.ne.s32.totalorder %s294, %s297
      %p303 = scmp.eq.s32.totalorder %s36, 0
      %p304 = por %p302, %p303
      %p305 = scmp.ne.s32.totalorder %s294, %s297
      %p306 = scmp.eq.s32.totalorder %s41, 3
      %p307 = por %p305, %p306
      %p308 = scmp.ne.s32.totalorder %s297, %s298
      %p309 = scmp.eq.s32.totalorder %s41, 0
      %p310 = por %p308, %p309
      %p311 = scmp.ne.s32.totalorder %s297, %s298
      %p312 = scmp.eq.s32.totalorder %s42, 3
      %p313 = por %p311, %p312
      %p315 = scmp.ne.s32.totalorder %s298, %s314
      %p316 = scmp.eq.s32.totalorder %s42, 0
      %p317 = por %p315, %p316
      %s318 = ssub.s32 %s43, %s55
      %s319 = ssub.s32 %s44, %s51
      %s320 = sor.u32 %s318, %s319
      %p321 = scmp.eq.s32.totalorder %s320, 0
      %s323 = sadd.s32 %s322, 1
      %s324 = scalar_select %p321, %s322, %s323
      %p327 = pneg %p321
      %p328 = scmp.eq.s32.totalorder %s36, 3
      %p329 = por %p327, %p328
      %p330 = scmp.ne.s32.totalorder %s322, %s325
      %p331 = scmp.eq.s32.totalorder %s36, 0
      %p332 = por %p330, %p331
      %p333 = scmp.ne.s32.totalorder %s322, %s325
      %p334 = scmp.eq.s32.totalorder %s41, 3
      %p335 = por %p333, %p334
      %p336 = scmp.ne.s32.totalorder %s325, %s326
      %p337 = scmp.eq.s32.totalorder %s41, 0
      %p338 = por %p336, %p337
      %p339 = scmp.ne.s32.totalorder %s325, %s326
      %p340 = scmp.eq.s32.totalorder %s42, 3
      %p341 = por %p339, %p340
      %p343 = scmp.ne.s32.totalorder %s326, %s342
      %p344 = scmp.eq.s32.totalorder %s42, 0
      %p345 = por %p343, %p344
      %p346 = scmp.le.s32.totalorder 1, %s36
      %p347 = scmp.lt.s32.totalorder %s36, 5
      %p348 = pnand %p346, %p347
      %p349 = pneg %p348
      // Predicated region
      $region9: #{tpu_custom_call.1} parent=5 // pred_check
        _
      $region10: #{tpu_custom_call.1} parent=5 // pred_check_branch
        %351 = sbr.rel (%p348) target = $region12
      $region11: #{tpu_custom_call.1} parent=5 // pred_region
        %s352 = ssub.s32 %s36, 1
        // Predicated region
        $region13: #{tpu_custom_call.1} parent=11 // pred_check
          %p353 = pneg %p153
        $region14: #{tpu_custom_call.1} parent=11 // pred_check_branch
          %355 = sbr.rel (%p353) target = $region16
        $region15: #{tpu_custom_call.1} parent=11 // pred_region
          %s357 = ssub.s32 512, 512
          %358 = vsyncadd [#allocation9], %s357
          %s359 = sshll.u32 [#allocation8], 4
          %s360 = int_to_ptr.vmem [resolvable:$true] %s359
          %365 = dma.hbm_to_vmem [thread:$0]  %s3, 512, %s360, [#allocation9], 128, 128, 8
        $region16: #{tpu_custom_call.1} parent=11 // pred_fallthru
          _
        // Predicated region
        $region17: #{tpu_custom_call.1} parent=11 // pred_check
          %p366 = pneg %p174
        $region18: #{tpu_custom_call.1} parent=11 // pred_check_branch
          %368 = sbr.rel (%p366) target = $region20
        $region19: #{tpu_custom_call.1} parent=11 // pred_region
          %s370 = ssub.s32 32, 32
          %371 = vsyncadd [#allocation9], %s370
          %s373 = sshll.u32 [#allocation10], 4
          %s374 = int_to_ptr.vmem [resolvable:$true] %s373
          %376 = dma.hbm_to_vmem [thread:$0]  %s4, 32, %s374, [#allocation9]
        $region20: #{tpu_custom_call.1} parent=11 // pred_fallthru
          _
      $region12: #{tpu_custom_call.1} parent=5 // pred_fallthru
        _
      %p377 = scmp.lt.s32.totalorder %s36, 4
      // Predicated region
      $region21: #{tpu_custom_call.1} parent=5 // pred_check
        %p378 = pneg %p377
      $region22: #{tpu_custom_call.1} parent=5 // pred_check_branch
        %380 = sbr.rel (%p378) target = $region24
      $region23: #{tpu_custom_call.1} parent=5 // pred_region
        // Predicated region
        $region25: #{tpu_custom_call.1} parent=23 // pred_check
          %p381 = pneg %p70
        $region26: #{tpu_custom_call.1} parent=23 // pred_check_branch
          %383 = sbr.rel (%p381) target = $region28
        $region27: #{tpu_custom_call.1} parent=23 // pred_region
          %s384 = sand.u32 %s60, 1
          %s385 = scalar_lea.sflag [#allocation3], %s384
          %s386 = sand.u32 %s60, 1
          %s387 = smul.addr %s386, 8
          %s388 = scalar_lea.vmem [#allocation2], %s387
          %s389 = smul.u32 2, %s44
          %s391 = ssub.s32 128, 128
          %392 = vsyncadd %s385, %s391
          %s393 = smul.addr %s43, 4
          %s394 = sadd.s32 %s389, %s393
          %s395 = smul.addr %s394, 64
          %s396 = scalar_lea.hbm %s0, %s395
          %s397 = sshll.u32 %s388, 4
          %s398 = int_to_ptr.vmem [resolvable:$true] %s397
          %403 = dma.hbm_to_vmem [thread:$0]  %s396, 128, %s398, %s385, 64, 64, 4
        $region28: #{tpu_custom_call.1} parent=23 // pred_fallthru
          _
        // Predicated region
        $region29: #{tpu_custom_call.1} parent=23 // pred_check
          %p404 = pneg %p98
        $region30: #{tpu_custom_call.1} parent=23 // pred_check_branch
          %406 = sbr.rel (%p404) target = $region32
        $region31: #{tpu_custom_call.1} parent=23 // pred_region
          %s407 = sand.u32 %s36, 1
          %s408 = scalar_lea.sflag [#allocation6], %s407
          %s409 = sand.u32 %s88, 1
          %s410 = smul.addr %s409, 16
          %s411 = scalar_lea.vmem [#allocation5], %s410
          %s412 = smul.u32 2, %s44
          %s414 = ssub.s32 256, 256
          %415 = vsyncadd %s408, %s414
          %s416 = smul.addr %s43, 4
          %s417 = sadd.s32 %s412, %s416
          %s418 = smul.addr %s417, 128
          %s419 = scalar_lea.hbm %s1, %s418
          %s420 = sshll.u32 %s411, 4
          %s421 = int_to_ptr.vmem [resolvable:$true] %s420
          %426 = dma.hbm_to_vmem [thread:$0]  %s419, 256, %s421, %s408, 128, 128, 8
        $region32: #{tpu_custom_call.1} parent=23 // pred_fallthru
          _
        // Predicated region
        $region33: #{tpu_custom_call.1} parent=23 // pred_check
          %p427 = pneg %p126
        $region34: #{tpu_custom_call.1} parent=23 // pred_check_branch
          %429 = sbr.rel (%p427) target = $region36
        $region35: #{tpu_custom_call.1} parent=23 // pred_region
          %s430 = sand.u32 %s36, 1
          %s431 = scalar_lea.sflag [#allocation6], %s430
          %s432 = sand.u32 %s116, 1
          %s433 = smul.addr %s432, 16
          %s434 = scalar_lea.vmem [#allocation7], %s433
          %s435 = smul.u32 2, %s44
          %s437 = ssub.s32 256, 256
          %438 = vsyncadd %s431, %s437
          %s439 = smul.addr %s43, 4
          %s440 = sadd.s32 %s435, %s439
          %s441 = smul.addr %s440, 128
          %s442 = scalar_lea.hbm %s2, %s441
          %s443 = sshll.u32 %s434, 4
          %s444 = int_to_ptr.vmem [resolvable:$true] %s443
          %449 = dma.hbm_to_vmem [thread:$0]  %s442, 256, %s444, %s431, 128, 128, 8
        $region36: #{tpu_custom_call.1} parent=23 // pred_fallthru
          _
        // Predicated region
        $region37: #{tpu_custom_call.1} parent=23 // pred_check
          %p450 = pneg %p194
        $region38: #{tpu_custom_call.1} parent=23 // pred_check_branch
          %452 = sbr.rel (%p450) target = $region40
        $region39: #{tpu_custom_call.1} parent=23 // pred_region
          %s453 = sand.u32 %s36, 1
          %s454 = scalar_lea.sflag [#allocation12], %s453
          %s455 = sand.u32 %s184, 1
          %s456 = smul.addr %s455, 8
          %s457 = scalar_lea.vmem [#allocation11], %s456
          %s459 = ssub.s32 128, 128
          %460 = vsyncadd %s454, %s459
          %s461 = smul.addr %s43, 128
          %s462 = scalar_lea.hbm %s5, %s461
          %s464 = sshll.u32 %s457, 4
          %s465 = int_to_ptr.vmem [resolvable:$true] %s464
          %467 = dma.hbm_to_vmem [thread:$0]  %s462, 128, %s465, %s454
        $region40: #{tpu_custom_call.1} parent=23 // pred_fallthru
          _
        // Predicated region
        $region41: #{tpu_custom_call.1} parent=23 // pred_check
          %p468 = pneg %p220
        $region42: #{tpu_custom_call.1} parent=23 // pred_check_branch
          %470 = sbr.rel (%p468) target = $region44
        $region43: #{tpu_custom_call.1} parent=23 // pred_region
          %s471 = sand.u32 %s36, 1
          %s472 = scalar_lea.sflag [#allocation12], %s471
          %s473 = sand.u32 %s210, 1
          %s474 = smul.addr %s473, 8
          %s475 = scalar_lea.vmem [#allocation13], %s474
          %s477 = ssub.s32 128, 128
          %478 = vsyncadd %s472, %s477
          %s479 = smul.addr %s43, 128
          %s480 = scalar_lea.hbm %s6, %s479
          %s482 = sshll.u32 %s475, 4
          %s483 = int_to_ptr.vmem [resolvable:$true] %s482
          %485 = dma.hbm_to_vmem [thread:$0]  %s480, 128, %s483, %s472
        $region44: #{tpu_custom_call.1} parent=23 // pred_fallthru
          _
      $region24: #{tpu_custom_call.1} parent=5 // pred_fallthru
        _
      %p486 = scmp.le.s32.totalorder 1, %s36
      %p487 = scmp.lt.s32.totalorder %s36, 5
      %p488 = pnand %p486, %p487
      %p489 = pneg %p488
      // Predicated region
      $region45: #{tpu_custom_call.1} parent=5 // pred_check
        _
      $region46: #{tpu_custom_call.1} parent=5 // pred_check_branch
        %491 = sbr.rel (%p488) target = $region48
      $region47: #{tpu_custom_call.1} parent=5 // pred_region
        %s492 = ssub.s32 %s36, 1
        %s493 = sand.u32 %s63, 1
        %s494 = scalar_lea.sflag [#allocation3], %s493
        %s495 = sand.u32 %s63, 1
        %s496 = smul.addr %s495, 8
        %s497 = scalar_lea.vmem [#allocation2], %s496
        // Predicated region
        $region49: #{tpu_custom_call.1} parent=47 // pred_check
          %p498 = pneg %p76
        $region50: #{tpu_custom_call.1} parent=47 // pred_check_branch
          %500 = sbr.rel (%p498) target = $region52
        $region51: #{tpu_custom_call.1} parent=47 // pred_region
          %501 = dma.done %s494, 128
        $region52: #{tpu_custom_call.1} parent=47 // pred_fallthru
          _
        %s502 = sand.u32 %s41, 1
        %s503 = scalar_lea.sflag [#allocation6], %s502
        %s504 = sand.u32 %s91, 1
        %s505 = smul.addr %s504, 16
        %s506 = scalar_lea.vmem [#allocation5], %s505
        // Predicated region
        $region53: #{tpu_custom_call.1} parent=47 // pred_check
          %p507 = pneg %p104
        $region54: #{tpu_custom_call.1} parent=47 // pred_check_branch
          %509 = sbr.rel (%p507) target = $region56
        $region55: #{tpu_custom_call.1} parent=47 // pred_region
          %510 = dma.done %s503, 256
        $region56: #{tpu_custom_call.1} parent=47 // pred_fallthru
          _
        %s511 = sand.u32 %s41, 1
        %s512 = scalar_lea.sflag [#allocation6], %s511
        %s513 = sand.u32 %s119, 1
        %s514 = smul.addr %s513, 16
        %s515 = scalar_lea.vmem [#allocation7], %s514
        // Predicated region
        $region57: #{tpu_custom_call.1} parent=47 // pred_check
          %p516 = pneg %p132
        $region58: #{tpu_custom_call.1} parent=47 // pred_check_branch
          %518 = sbr.rel (%p516) target = $region60
        $region59: #{tpu_custom_call.1} parent=47 // pred_region
          %519 = dma.done %s512, 256
        $region60: #{tpu_custom_call.1} parent=47 // pred_fallthru
          _
        // Predicated region
        $region61: #{tpu_custom_call.1} parent=47 // pred_check
          %p520 = pneg %p153
        $region62: #{tpu_custom_call.1} parent=47 // pred_check_branch
          %522 = sbr.rel (%p520) target = $region64
        $region63: #{tpu_custom_call.1} parent=47 // pred_region
          %523 = dma.done [#allocation9], 512
        $region64: #{tpu_custom_call.1} parent=47 // pred_fallthru
          _
        // Predicated region
        $region65: #{tpu_custom_call.1} parent=47 // pred_check
          %p524 = pneg %p174
        $region66: #{tpu_custom_call.1} parent=47 // pred_check_branch
          %526 = sbr.rel (%p524) target = $region68
        $region67: #{tpu_custom_call.1} parent=47 // pred_region
          %527 = dma.done [#allocation9], 32
        $region68: #{tpu_custom_call.1} parent=47 // pred_fallthru
          _
        %s528 = sand.u32 %s41, 1
        %s529 = scalar_lea.sflag [#allocation12], %s528
        %s530 = sand.u32 %s187, 1
        %s531 = smul.addr %s530, 8
        %s532 = scalar_lea.vmem [#allocation11], %s531
        // Predicated region
        $region69: #{tpu_custom_call.1} parent=47 // pred_check
          %p533 = pneg %p200
        $region70: #{tpu_custom_call.1} parent=47 // pred_check_branch
          %535 = sbr.rel (%p533) target = $region72
        $region71: #{tpu_custom_call.1} parent=47 // pred_region
          %536 = dma.done %s529, 128
        $region72: #{tpu_custom_call.1} parent=47 // pred_fallthru
          _
        %s537 = sand.u32 %s41, 1
        %s538 = scalar_lea.sflag [#allocation12], %s537
        %s539 = sand.u32 %s213, 1
        %s540 = smul.addr %s539, 8
        %s541 = scalar_lea.vmem [#allocation13], %s540
        // Predicated region
        $region73: #{tpu_custom_call.1} parent=47 // pred_check
          %p542 = pneg %p226
        $region74: #{tpu_custom_call.1} parent=47 // pred_check_branch
          %544 = sbr.rel (%p542) target = $region76
        $region75: #{tpu_custom_call.1} parent=47 // pred_region
          %545 = dma.done %s538, 128
        $region76: #{tpu_custom_call.1} parent=47 // pred_fallthru
          _
        %s546 = sand.u32 %s63, 1
        %s547 = scalar_lea.sflag [#allocation3], %s546
        %s548 = sand.u32 %s63, 1
        %s549 = smul.addr %s548, 8
        %s550 = scalar_lea.vmem [#allocation2], %s549
        %p551 = pneg %p76
        %p552 = pneg %p73
        %s553 = sand.u32 %s41, 1
        %s554 = scalar_lea.sflag [#allocation6], %s553
        %s555 = sand.u32 %s91, 1
        %s556 = smul.addr %s555, 16
        %s557 = scalar_lea.vmem [#allocation5], %s556
        %p558 = pneg %p104
        %p559 = pneg %p101
        %s560 = sand.u32 %s41, 1
        %s561 = scalar_lea.sflag [#allocation6], %s560
        %s562 = sand.u32 %s119, 1
        %s563 = smul.addr %s562, 16
        %s564 = scalar_lea.vmem [#allocation7], %s563
        %p565 = pneg %p132
        %p566 = pneg %p129
        %p567 = pneg %p153
        %p568 = pneg %p150
        %p569 = pneg %p174
        %p570 = pneg %p171
        %s571 = sand.u32 %s41, 1
        %s572 = scalar_lea.sflag [#allocation12], %s571
        %s573 = sand.u32 %s187, 1
        %s574 = smul.addr %s573, 8
        %s575 = scalar_lea.vmem [#allocation11], %s574
        %p576 = pneg %p200
        %p577 = pneg %p197
        %s578 = sand.u32 %s41, 1
        %s579 = scalar_lea.sflag [#allocation12], %s578
        %s580 = sand.u32 %s213, 1
        %s581 = smul.addr %s580, 8
        %s582 = scalar_lea.vmem [#allocation13], %s581
        %p583 = pneg %p226
        %p584 = pneg %p223
        %p585 = pneg %p254
        %p586 = pneg %p251
        %s587 = sand.u32 %s241, 1
        %s588 = scalar_lea.sflag [#allocation4], %s587
        %s589 = sand.u32 %s241, 1
        %s590 = smul.addr %s589, 16
        %s591 = scalar_lea.vmem [#allocation14], %s590
        %p592 = pneg %p282
        %p593 = pneg %p279
        %s594 = sand.u32 %s41, 1
        %s595 = scalar_lea.sflag [#allocation16], %s594
        %s596 = sand.u32 %s269, 1
        %s597 = smul.addr %s596, 16
        %s598 = scalar_lea.vmem [#allocation15], %s597
        %p599 = pneg %p310
        %p600 = pneg %p307
        %s601 = sand.u32 %s41, 1
        %s602 = scalar_lea.sflag [#allocation16], %s601
        %s603 = sand.u32 %s297, 1
        %s604 = smul.addr %s603, 16
        %s605 = scalar_lea.vmem [#allocation17], %s604
        %p606 = pneg %p338
        %p607 = pneg %p335
        %s608 = sand.u32 %s325, 1
        %s609 = scalar_lea.sflag [#allocation19], %s608
        %s610 = sand.u32 %s325, 1
        %s611 = smul.addr %s610, 16
        %s612 = scalar_lea.vmem [#allocation18], %s611
        %s613 = smul.u32 2, %s46
        %s614 = smul.u32 2, %s46
        %s615 = smul.u32 2, %s46
        %s616 = smul.u32 2, %s46
        %s617 = smul.u32 2, %s46
        %s618 = smul.u32 2, %s46
        %s619 = smul.u32 2, %s46
        %v621 = vld [vmem:[%s497] sm:$0xf]
        %v622 = vld [vmem:[%s497 + $0x4] sm:$0xf]
        %v623 = vld [vmem:[#allocation8] sm:$0xff]
        %v624 = vld [vmem:[#allocation8 + $0x8] sm:$0xff]
        %v625 = vld [vmem:[#allocation8 + $0x10] sm:$0xff]
        %v626 = vld [vmem:[#allocation8 + $0x18] sm:$0xff]
        %v627 = vld [vmem:[#allocation10] sm:$0x3]
        %v629 = vlaneseq
        %v630 = vshrl.u32 %v629, 7
        %v631 = vsub.s32 0, %v630
        %v632 = vrot.slane %v627, %v631
        %v633 = vlaneseq
        %v634 = vshrl.u32 %v633, 7
        %v635 = vsub.s32 1, %v634
        %v636 = vrot.slane %v627, %v635
        %v641 = vunpack.c.l.b16 %v621
        %v642 = vunpack.c.l.b16 %v622
        %v643 = vpack.c.b16 %v642, %v641
        %v648 = vunpack.c.l.b16 %v623
        %v649 = vunpack.c.h.b16 %v623
        %v650 = vunpack.c.l.b16 %v624
        %v651 = vunpack.c.h.b16 %v624
        %v652 = vunpack.c.l.b16 %v625
        %v653 = vunpack.c.h.b16 %v625
        %v654 = vunpack.c.l.b16 %v626
        %v655 = vunpack.c.h.b16 %v626
        %v656 = vpack.c.b16 %v650, %v648
        %v657 = vpack.c.b16 %v651, %v649
        %v658 = vpack.c.b16 %v654, %v652
        %v659 = vpack.c.b16 %v655, %v653
        %vm664 = vcmask 261120
        %v666 = vsel %vm664, %v643, 0
        %668 = vmatprep.subr.bf16.mxu0 %v657
        %669 = vmatpush1.bf16.msra.mxu0 %v656
        %670 = vmatprep.subr.bf16.mxu0 %v659
        %671 = vmatpush1.bf16.msra.mxu0 %v658
        %672 = vmatprep.subr.bf16.mxu0 0
        %673 = vmatpush1.bf16.msra.mxu0 0
        %674 = vmatprep.subr.bf16.mxu0 0
        %675 = vmatpush1.bf16.msra.mxu0 0
        %676 = vmatprep.subr.bf16.mxu0 0
        %677 = vmatpush1.bf16.msra.mxu0 0
        %678 = vmatprep.subr.bf16.mxu0 0
        %679 = vmatpush1.bf16.msra.mxu0 0
        %680 = vmatprep.subr.bf16.mxu0 0
        %681 = vmatpush1.bf16.msra.mxu0 0
        %682 = vmatprep.subr.bf16.mxu0 0
        %683 = vmatpush1.bf16.msra.mxu0 0
        %684 = vmatprep.subr.bf16.mxu0 0
        %685 = vmatpush1.bf16.msra.mxu0 0
        %686 = vmatprep.subr.bf16.mxu0 0
        %687 = vmatpush1.bf16.msra.mxu0 0
        %688 = vmatprep.subr.bf16.mxu0 0
        %689 = vmatpush1.bf16.msra.mxu0 0
        %690 = vmatprep.subr.bf16.mxu0 0
        %691 = vmatpush1.bf16.msra.mxu0 0
        %692 = vmatprep.subr.bf16.mxu0 0
        %693 = vmatpush1.bf16.msra.mxu0 0
        %694 = vmatprep.subr.bf16.mxu0 0
        %695 = vmatpush1.bf16.msra.mxu0 0
        %696 = vmatprep.subr.bf16.mxu0 0
        %697 = vmatpush1.bf16.msra.mxu0 0
        %698 = vmatprep.subr.bf16.mxu0 0
        %699 = vmatpush1.bf16.msra.mxu0 0
        %700 = vmatprep.mubr.bf16.mxu0 0
        %701 = vmatmul.mubr.bf16.gmra.mrb[0].mxu0 %v666
        %v702 = vpop.f32.mrb[0].mxu0
        %v703 = vadd.f32 %v632, %v702
        %v704 = vpop.f32.mrb[0].mxu0
        %v705 = vadd.f32 %v636, %v704
        %v706 = vpop.f32.mrb[0].mxu0
        %v707 = vadd.f32 %v632, %v706
        %v708 = vpop.f32.mrb[0].mxu0
        %v709 = vadd.f32 %v636, %v708
        %710 = vdwg.mxu0
        %711 = vmax.xlane.f32.xlu0 %v703
        %v712 = vpop.xlane.xlu0 %711
        %713 = vmax.xlane.f32.xlu0 %v707
        %v714 = vpop.xlane.xlu0 %713
        %v715 = vsub.f32 %v703, %v712
        %v716 = vsub.f32 %v707, %v714
        %v717 = vmul.f32 %v715, 1.442695
        %v718 = vpow.pop %v717
        %v719 = vmul.f32 %v716, 1.442695
        %v720 = vpow.pop %v719
        %721 = vadd.xlane.f32.xlu0 %v718
        %v722 = vpop.xlane.xlu0 %721
        %723 = vadd.xlane.f32.xlu0 %v720
        %v724 = vpop.xlane.xlu0 %723
        %725 = vmax.xlane.f32.xlu0 %v705
        %v726 = vpop.xlane.xlu0 %725
        %727 = vmax.xlane.f32.xlu0 %v709
        %v728 = vpop.xlane.xlu0 %727
        %v729 = vsub.f32 %v705, %v726
        %v730 = vsub.f32 %v709, %v728
        %v731 = vmul.f32 %v729, 1.442695
        %v732 = vpow.pop %v731
        %v733 = vmul.f32 %v730, 1.442695
        %v734 = vpow.pop %v733
        %735 = vadd.xlane.f32.xlu0 %v732
        %v736 = vpop.xlane.xlu0 %735
        %737 = vadd.xlane.f32.xlu0 %v734
        %v738 = vpop.xlane.xlu0 %737
        %v739 = vlog2.pop %v736
        %v740 = vmul.f32 %v739, 0.6931472
        %v741 = vlog2.pop %v738
        %v742 = vmul.f32 %v741, 0.6931472
        %v743 = vadd.f32 %v740, %v726
        %v744 = vadd.f32 %v742, %v728
        %v745 = vsub.f32 %v705, %v743
        %v746 = vsub.f32 %v709, %v744
        %747 = vst [vmem:[%s612] sm:$0xff] %v745
        %748 = vst [vmem:[%s612 + $0x8] sm:$0xff] %v746
        %v749 = vmul.f32 %v745, 1.442695
        %v750 = vpow.pop %v749
        %v751 = vmul.f32 %v746, 1.442695
        %v752 = vpow.pop %v751
        %v753 = vrcp.pop %v722
        %v754 = vrcp.pop %v724
        %v755 = vmul.f32 %v750, %v753
        %v756 = vmul.f32 %v752, %v754
        %758 = vset.pattern.permute.xlu0 0
        %759 = vperm.xlu0 %758, %v755
        %v760 = vpop.permute.xlu0 %759
        %763 = vset.pattern.permute.xlu0 0
        %764 = vperm.xlu0 %763, %v756
        %v765 = vpop.permute.xlu0 %764
        %v767 = vmul.f32 %v718, %v760
        %v768 = vmul.f32 %v720, %v765
        %769 = vst [vmem:[%s591] sm:$0xff] %v767
        %770 = vst [vmem:[%s591 + $0x8] sm:$0xff] %v768
        %v771 = vld [vmem:[%s506] sm:$0xff]
        %v772 = vld [vmem:[%s506 + $0x8] sm:$0xff]
        %774 = vset.pattern.permute.xlu0 1
        %775 = vperm.xlu0 %774, %v750
        %v776 = vpop.permute.xlu0 %775
        %779 = vset.pattern.permute.xlu0 1
        %780 = vperm.xlu0 %779, %v752
        %v781 = vpop.permute.xlu0 %780
        %v783 = vmul.f32 %v771, %v776
        %v784 = vmul.f32 %v772, %v781
        %v785 = vld [vmem:[%s515] sm:$0xff]
        %v786 = vld [vmem:[%s515 + $0x8] sm:$0xff]
        %787 = vset.pattern.permute.xlu0 2
        %788 = vperm.xlu0 %787, %v750
        %v789 = vpop.permute.xlu0 %788
        %791 = vset.pattern.permute.xlu0 2
        %792 = vperm.xlu0 %791, %v752
        %v793 = vpop.permute.xlu0 %792
        %v795 = vmul.f32 %v785, %v789
        %v796 = vmul.f32 %v786, %v793
        %v797 = vld [vmem:[%s532] sm:$0xff]
        %vm798 = vcmask 64512
        %v800 = vsel %vm798, %v783, 0
        %v803 = vsel %vm798, %v784, 0
        %805 = vmatprep.subr.mxu0 0.0
        %806 = vmatpush1.msra.mxu0 %v797
        %807 = vmatprep.subr.mxu0 0.0
        %808 = vmatpush1.msra.mxu0 0.0
        %809 = vmatprep.subr.mxu0 0.0
        %810 = vmatpush1.msra.mxu0 0.0
        %811 = vmatprep.subr.mxu0 0.0
        %812 = vmatpush1.msra.mxu0 0.0
        %813 = vmatprep.subr.mxu0 0.0
        %814 = vmatpush1.msra.mxu0 0.0
        %815 = vmatprep.subr.mxu0 0.0
        %816 = vmatpush1.msra.mxu0 0.0
        %817 = vmatprep.subr.mxu0 0.0
        %818 = vmatpush1.msra.mxu0 0.0
        %819 = vmatprep.subr.mxu0 0.0
        %820 = vmatpush1.msra.mxu0 0.0
        %821 = vmatprep.subr.mxu0 0.0
        %822 = vmatpush1.msra.mxu0 0.0
        %823 = vmatprep.subr.mxu0 0.0
        %824 = vmatpush1.msra.mxu0 0.0
        %825 = vmatprep.subr.mxu0 0.0
        %826 = vmatpush1.msra.mxu0 0.0
        %827 = vmatprep.subr.mxu0 0.0
        %828 = vmatpush1.msra.mxu0 0.0
        %829 = vmatprep.subr.mxu0 0.0
        %830 = vmatpush1.msra.mxu0 0.0
        %831 = vmatprep.subr.mxu0 0.0
        %832 = vmatpush1.msra.mxu0 0.0
        %833 = vmatprep.subr.mxu0 0.0
        %834 = vmatpush1.msra.mxu0 0.0
        %835 = vmatprep.subr.mxu0 0.0
        %836 = vmatpush1.msra.mxu0 0.0
        %837 = vmatprep.subr.mxu0 0.0
        %838 = vmatpush1.msra.mxu0 0.0
        %839 = vmatprep.subr.mxu0 0.0
        %840 = vmatpush1.msra.mxu0 0.0
        %841 = vmatprep.subr.mxu0 0.0
        %842 = vmatpush1.msra.mxu0 0.0
        %843 = vmatprep.subr.mxu0 0.0
        %844 = vmatpush1.msra.mxu0 0.0
        %845 = vmatprep.subr.mxu0 0.0
        %846 = vmatpush1.msra.mxu0 0.0
        %847 = vmatprep.subr.mxu0 0.0
        %848 = vmatpush1.msra.mxu0 0.0
        %849 = vmatprep.subr.mxu0 0.0
        %850 = vmatpush1.msra.mxu0 0.0
        %851 = vmatprep.subr.mxu0 0.0
        %852 = vmatpush1.msra.mxu0 0.0
        %853 = vmatprep.subr.mxu0 0.0
        %854 = vmatpush1.msra.mxu0 0.0
        %855 = vmatprep.subr.mxu0 0.0
        %856 = vmatpush1.msra.mxu0 0.0
        %857 = vmatprep.subr.mxu0 0.0
        %858 = vmatpush1.msra.mxu0 0.0
        %859 = vmatprep.subr.mxu0 0.0
        %860 = vmatpush1.msra.mxu0 0.0
        %861 = vmatprep.subr.mxu0 0.0
        %862 = vmatpush1.msra.mxu0 0.0
        %863 = vmatprep.subr.mxu0 0.0
        %864 = vmatpush1.msra.mxu0 0.0
        %865 = vmatprep.subr.mxu0 0.0
        %866 = vmatpush1.msra.mxu0 0.0
        %867 = vmatprep.subr.mxu0 0.0
        %868 = vmatpush1.msra.mxu0 0.0
        %869 = vmatprep.mubr.f32.mxu0 0.0
        %870 = vmatmul.mubr.f32.gmra.mrb[0].mxu0 %v800
        %v871 = vpop.f32.mrb[0].mxu0
        %v872 = vadd.f32 0.0, %v871
        %v873 = vpop.f32.mrb[0].mxu0
        %874 = vmatprep.mubr.f32.mxu0 0.0
        %875 = vmatmul.mubr.f32.gmra.mrb[0].mxu0 %v803
        %v876 = vpop.f32.mrb[0].mxu0
        %v877 = vadd.f32 0.0, %v876
        %v878 = vpop.f32.mrb[0].mxu0
        %879 = vdwg.mxu0
        %880 = vst [vmem:[%s598] sm:$0xff] %v872
        %881 = vst [vmem:[%s598 + $0x8] sm:$0xff] %v877
        %v882 = vld [vmem:[%s541] sm:$0xff]
        %v884 = vsel %vm798, %v795, 0
        %v887 = vsel %vm798, %v796, 0
        %889 = vmatprep.subr.mxu0 0.0
        %890 = vmatpush1.msra.mxu0 %v882
        %891 = vmatprep.subr.mxu0 0.0
        %892 = vmatpush1.msra.mxu0 0.0
        %893 = vmatprep.subr.mxu0 0.0
        %894 = vmatpush1.msra.mxu0 0.0
        %895 = vmatprep.subr.mxu0 0.0
        %896 = vmatpush1.msra.mxu0 0.0
        %897 = vmatprep.subr.mxu0 0.0
        %898 = vmatpush1.msra.mxu0 0.0
        %899 = vmatprep.subr.mxu0 0.0
        %900 = vmatpush1.msra.mxu0 0.0
        %901 = vmatprep.subr.mxu0 0.0
        %902 = vmatpush1.msra.mxu0 0.0
        %903 = vmatprep.subr.mxu0 0.0
        %904 = vmatpush1.msra.mxu0 0.0
        %905 = vmatprep.subr.mxu0 0.0
        %906 = vmatpush1.msra.mxu0 0.0
        %907 = vmatprep.subr.mxu0 0.0
        %908 = vmatpush1.msra.mxu0 0.0
        %909 = vmatprep.subr.mxu0 0.0
        %910 = vmatpush1.msra.mxu0 0.0
        %911 = vmatprep.subr.mxu0 0.0
        %912 = vmatpush1.msra.mxu0 0.0
        %913 = vmatprep.subr.mxu0 0.0
        %914 = vmatpush1.msra.mxu0 0.0
        %915 = vmatprep.subr.mxu0 0.0
        %916 = vmatpush1.msra.mxu0 0.0
        %917 = vmatprep.subr.mxu0 0.0
        %918 = vmatpush1.msra.mxu0 0.0
        %919 = vmatprep.subr.mxu0 0.0
        %920 = vmatpush1.msra.mxu0 0.0
        %921 = vmatprep.subr.mxu0 0.0
        %922 = vmatpush1.msra.mxu0 0.0
        %923 = vmatprep.subr.mxu0 0.0
        %924 = vmatpush1.msra.mxu0 0.0
        %925 = vmatprep.subr.mxu0 0.0
        %926 = vmatpush1.msra.mxu0 0.0
        %927 = vmatprep.subr.mxu0 0.0
        %928 = vmatpush1.msra.mxu0 0.0
        %929 = vmatprep.subr.mxu0 0.0
        %930 = vmatpush1.msra.mxu0 0.0
        %931 = vmatprep.subr.mxu0 0.0
        %932 = vmatpush1.msra.mxu0 0.0
        %933 = vmatprep.subr.mxu0 0.0
        %934 = vmatpush1.msra.mxu0 0.0
        %935 = vmatprep.subr.mxu0 0.0
        %936 = vmatpush1.msra.mxu0 0.0
        %937 = vmatprep.subr.mxu0 0.0
        %938 = vmatpush1.msra.mxu0 0.0
        %939 = vmatprep.subr.mxu0 0.0
        %940 = vmatpush1.msra.mxu0 0.0
        %941 = vmatprep.subr.mxu0 0.0
        %942 = vmatpush1.msra.mxu0 0.0
        %943 = vmatprep.subr.mxu0 0.0
        %944 = vmatpush1.msra.mxu0 0.0
        %945 = vmatprep.subr.mxu0 0.0
        %946 = vmatpush1.msra.mxu0 0.0
        %947 = vmatprep.subr.mxu0 0.0
        %948 = vmatpush1.msra.mxu0 0.0
        %949 = vmatprep.subr.mxu0 0.0
        %950 = vmatpush1.msra.mxu0 0.0
        %951 = vmatprep.subr.mxu0 0.0
        %952 = vmatpush1.msra.mxu0 0.0
        %953 = vmatprep.mubr.f32.mxu0 0.0
        %954 = vmatmul.mubr.f32.gmra.mrb[0].mxu0 %v884
        %v955 = vpop.f32.mrb[0].mxu0
        %v956 = vadd.f32 0.0, %v955
        %v957 = vpop.f32.mrb[0].mxu0
        %958 = vmatprep.mubr.f32.mxu0 0.0
        %959 = vmatmul.mubr.f32.gmra.mrb[0].mxu0 %v887
        %v960 = vpop.f32.mrb[0].mxu0
        %v961 = vadd.f32 0.0, %v960
        %v962 = vpop.f32.mrb[0].mxu0
        %963 = vdwg.mxu0
        %964 = vst [vmem:[%s605] sm:$0xff] %v956
        %965 = vst [vmem:[%s605 + $0x8] sm:$0xff] %v961
        %s966 = sand.u32 %s241, 1
        %s967 = scalar_lea.sflag [#allocation4], %s966
        %s968 = sand.u32 %s241, 1
        %s969 = smul.addr %s968, 16
        %s970 = scalar_lea.vmem [#allocation14], %s969
        %s971 = sand.u32 %s41, 1
        %s972 = scalar_lea.sflag [#allocation16], %s971
        %s973 = sand.u32 %s269, 1
        %s974 = smul.addr %s973, 16
        %s975 = scalar_lea.vmem [#allocation15], %s974
        %s976 = sand.u32 %s41, 1
        %s977 = scalar_lea.sflag [#allocation16], %s976
        %s978 = sand.u32 %s297, 1
        %s979 = smul.addr %s978, 16
        %s980 = scalar_lea.vmem [#allocation17], %s979
        %s981 = sand.u32 %s325, 1
        %s982 = scalar_lea.sflag [#allocation19], %s981
        %s983 = sand.u32 %s325, 1
        %s984 = smul.addr %s983, 16
        %s985 = scalar_lea.vmem [#allocation18], %s984
        // Predicated region
        $region77: #{tpu_custom_call.1} parent=47 // pred_check
          %p986 = pneg %p251
        $region78: #{tpu_custom_call.1} parent=47 // pred_check_branch
          %988 = sbr.rel (%p986) target = $region80
        $region79: #{tpu_custom_call.1} parent=47 // pred_region
          %s989 = smul.u32 2, %s46
          %s991 = ssub.s32 256, 256
          %992 = vsyncadd %s967, %s991
          %s993 = smul.addr %s45, 4
          %s994 = sadd.s32 %s989, %s993
          %s995 = smul.addr %s994, 128
          %s996 = scalar_lea.hbm %s7, %s995
          %s997 = sshll.u32 %s970, 4
          %s998 = int_to_ptr.vmem [resolvable:$true] %s997
          %1003 = dma.vmem_to_hbm [thread:$0]  %s998, 256, %s996, %s967, 128, 128, 8
        $region80: #{tpu_custom_call.1} parent=47 // pred_fallthru
          _
        // Predicated region
        $region81: #{tpu_custom_call.1} parent=47 // pred_check
          %p1004 = pneg %p279
        $region82: #{tpu_custom_call.1} parent=47 // pred_check_branch
          %1006 = sbr.rel (%p1004) target = $region84
        $region83: #{tpu_custom_call.1} parent=47 // pred_region
          %s1007 = smul.u32 2, %s46
          %s1009 = ssub.s32 256, 256
          %1010 = vsyncadd %s972, %s1009
          %s1011 = smul.addr %s45, 4
          %s1012 = sadd.s32 %s1007, %s1011
          %s1013 = smul.addr %s1012, 128
          %s1014 = scalar_lea.hbm %s8, %s1013
          %s1015 = sshll.u32 %s975, 4
          %s1016 = int_to_ptr.vmem [resolvable:$true] %s1015
          %1021 = dma.vmem_to_hbm [thread:$0]  %s1016, 256, %s1014, %s972, 128, 128, 8
        $region84: #{tpu_custom_call.1} parent=47 // pred_fallthru
          _
        // Predicated region
        $region85: #{tpu_custom_call.1} parent=47 // pred_check
          %p1022 = pneg %p307
        $region86: #{tpu_custom_call.1} parent=47 // pred_check_branch
          %1024 = sbr.rel (%p1022) target = $region88
        $region87: #{tpu_custom_call.1} parent=47 // pred_region
          %s1025 = smul.u32 2, %s46
          %s1027 = ssub.s32 256, 256
          %1028 = vsyncadd %s977, %s1027
          %s1029 = smul.addr %s45, 4
          %s1030 = sadd.s32 %s1025, %s1029
          %s1031 = smul.addr %s1030, 128
          %s1032 = scalar_lea.hbm %s9, %s1031
          %s1033 = sshll.u32 %s980, 4
          %s1034 = int_to_ptr.vmem [resolvable:$true] %s1033
          %1039 = dma.vmem_to_hbm [thread:$0]  %s1034, 256, %s1032, %s977, 128, 128, 8
        $region88: #{tpu_custom_call.1} parent=47 // pred_fallthru
          _
        // Predicated region
        $region89: #{tpu_custom_call.1} parent=47 // pred_check
          %p1040 = pneg %p335
        $region90: #{tpu_custom_call.1} parent=47 // pred_check_branch
          %1042 = sbr.rel (%p1040) target = $region92
        $region91: #{tpu_custom_call.1} parent=47 // pred_region
          %s1043 = smul.u32 2, %s46
          %s1045 = ssub.s32 256, 256
          %1046 = vsyncadd %s982, %s1045
          %s1047 = smul.addr %s45, 4
          %s1048 = sadd.s32 %s1043, %s1047
          %s1049 = smul.addr %s1048, 128
          %s1050 = scalar_lea.hbm %s10, %s1049
          %s1051 = sshll.u32 %s985, 4
          %s1052 = int_to_ptr.vmem [resolvable:$true] %s1051
          %1057 = dma.vmem_to_hbm [thread:$0]  %s1052, 256, %s1050, %s982, 128, 128, 8
        $region92: #{tpu_custom_call.1} parent=47 // pred_fallthru
          _
      $region48: #{tpu_custom_call.1} parent=5 // pred_fallthru
        _
      %p1058 = scmp.le.s32.totalorder 2, %s36
      // Predicated region
      $region93: #{tpu_custom_call.1} parent=5 // pred_check
        %p1059 = pneg %p1058
      $region94: #{tpu_custom_call.1} parent=5 // pred_check_branch
        %1061 = sbr.rel (%p1059) target = $region96
      $region95: #{tpu_custom_call.1} parent=5 // pred_region
        %s1062 = ssub.s32 %s36, 2
        // Predicated region
        $region97: #{tpu_custom_call.1} parent=95 // pred_check
          %p1063 = pneg %p257
        $region98: #{tpu_custom_call.1} parent=95 // pred_check_branch
          %1065 = sbr.rel (%p1063) target = $region100
        $region99: #{tpu_custom_call.1} parent=95 // pred_region
          %s1066 = sand.u32 %s242, 1
          %s1067 = scalar_lea.sflag [#allocation4], %s1066
          %s1068 = sand.u32 %s242, 1
          %s1069 = smul.addr %s1068, 16
          %s1070 = scalar_lea.vmem [#allocation14], %s1069
          %1071 = dma.done %s1067, 256
        $region100: #{tpu_custom_call.1} parent=95 // pred_fallthru
          _
        // Predicated region
        $region101: #{tpu_custom_call.1} parent=95 // pred_check
          %p1072 = pneg %p285
        $region102: #{tpu_custom_call.1} parent=95 // pred_check_branch
          %1074 = sbr.rel (%p1072) target = $region104
        $region103: #{tpu_custom_call.1} parent=95 // pred_region
          %s1075 = sand.u32 %s42, 1
          %s1076 = scalar_lea.sflag [#allocation16], %s1075
          %s1077 = sand.u32 %s270, 1
          %s1078 = smul.addr %s1077, 16
          %s1079 = scalar_lea.vmem [#allocation15], %s1078
          %1080 = dma.done %s1076, 256
        $region104: #{tpu_custom_call.1} parent=95 // pred_fallthru
          _
        // Predicated region
        $region105: #{tpu_custom_call.1} parent=95 // pred_check
          %p1081 = pneg %p313
        $region106: #{tpu_custom_call.1} parent=95 // pred_check_branch
          %1083 = sbr.rel (%p1081) target = $region108
        $region107: #{tpu_custom_call.1} parent=95 // pred_region
          %s1084 = sand.u32 %s42, 1
          %s1085 = scalar_lea.sflag [#allocation16], %s1084
          %s1086 = sand.u32 %s298, 1
          %s1087 = smul.addr %s1086, 16
          %s1088 = scalar_lea.vmem [#allocation17], %s1087
          %1089 = dma.done %s1085, 256
        $region108: #{tpu_custom_call.1} parent=95 // pred_fallthru
          _
        // Predicated region
        $region109: #{tpu_custom_call.1} parent=95 // pred_check
          %p1090 = pneg %p341
        $region110: #{tpu_custom_call.1} parent=95 // pred_check_branch
          %1092 = sbr.rel (%p1090) target = $region112
        $region111: #{tpu_custom_call.1} parent=95 // pred_region
          %s1093 = sand.u32 %s326, 1
          %s1094 = scalar_lea.sflag [#allocation19], %s1093
          %s1095 = sand.u32 %s326, 1
          %s1096 = smul.addr %s1095, 16
          %s1097 = scalar_lea.vmem [#allocation18], %s1096
          %1098 = dma.done %s1094, 256
        $region112: #{tpu_custom_call.1} parent=95 // pred_fallthru
          _
      $region96: #{tpu_custom_call.1} parent=5 // pred_fallthru
        _
    $region6: #{tpu_custom_call.1} parent=1 // loop_footer
      %s40 = sadd.s32 1, %s36
    $region7: #{tpu_custom_call.1} parent=1 // loop_footer_branch
      %35 = sbr.rel target = $region3
    $region8: #{tpu_custom_call.1} parent=1 // loop_exit
      _
    %1099 = vsyncpa [#allocation3], 1
    %s1100 = scalar_lea.sflag [#allocation3], 1
    %1101 = vsyncpa %s1100, 1
    %1102 = vsyncpa [#allocation6], 1
    %s1103 = scalar_lea.sflag [#allocation6], 1
    %1104 = vsyncpa %s1103, 1
    %1105 = vsyncpa [#allocation9], 1
    %1106 = vsyncpa [#allocation12], 1
    %s1107 = scalar_lea.sflag [#allocation12], 1
    %1108 = vsyncpa %s1107, 1
    %1109 = vsyncpa [#allocation4], 1
    %s1110 = scalar_lea.sflag [#allocation4], 1
    %1111 = vsyncpa %s1110, 1
    %1112 = vsyncpa [#allocation16], 1
    %s1113 = scalar_lea.sflag [#allocation16], 1
    %1114 = vsyncpa %s1113, 1
    %1115 = vsyncpa [#allocation19], 1
    %s1116 = scalar_lea.sflag [#allocation19], 1
    %1117 = vsyncpa %s1116, 1

// kernel: tpu_custom_call.1
$region0: #{tpu_custom_call.1}
  #allocation0 [shape = 'u32[]', space=smem, size = 0x4, offset = 0x4, fixed_abs, tag = 'smem constant byte address 0x4 - core index']
  #allocation1 [shape = 'u32[144,128]{1,0:T(1,128)}', space=vmem, size = 0x12000, scoped, tag = 'internal scratch']
  %s0 = inlined_call_operand.hbm [shape: bf16[2,32,32], index: 0, kind: input, shape index: {}]
  %s1 = inlined_call_operand.hbm [shape: f32[2,32,8], index: 1, kind: input, shape index: {}]
  %s2 = inlined_call_operand.hbm [shape: f32[2,32,8], index: 2, kind: input, shape index: {}]
  %s3 = inlined_call_operand.hbm [shape: bf16[32,256], index: 3, kind: input, shape index: {}]
  %s4 = inlined_call_operand.hbm [shape: f32[1,256], index: 4, kind: input, shape index: {}]
  %s5 = inlined_call_operand.hbm [shape: f32[2,8,128], index: 5, kind: input, shape index: {}]
  %s6 = inlined_call_operand.hbm [shape: f32[2,8,128], index: 6, kind: input, shape index: {}]
  %s7 = inlined_call_operand.hbm [shape: f32[2,32,128], index: 7, kind: output, shape index: {0}]
  %s8 = inlined_call_operand.hbm [shape: f32[2,32,128], index: 8, kind: output, shape index: {1}]
  %s9 = inlined_call_operand.hbm [shape: f32[2,32,128], index: 9, kind: output, shape index: {2}]
  %s10 = inlined_call_operand.hbm [shape: f32[2,32,128], index: 10, kind: output, shape index: {3}]
  %11 = xla_tuple %s7, %s8, %s9, %s10
  %s12 = sld [smem:[#allocation0]]
  $region113: #{tpu_custom_call.1} parent=0
    _
  %s14 = ssub.s32 1, %s12
  %s15 = scalar_select 0, %s14, %s12
  $region1: #{tpu_custom_call.1} parent=0
    #allocation2 [shape = 'u8[8192]{0}', space=vmem, size = 0x2000, scoped, tag = 'input window, operand 0']
    #allocation3 [shape = 's32[2]{0}', space=sflag, size = 0x8, scoped, tag = 'scoped memory for tpu_custom_call.1']
    #allocation4 [shape = 's32[2]{0}', space=sflag, size = 0x8, scoped, tag = 'scoped memory for tpu_custom_call.1']
    #allocation5 [shape = 'u8[16384]{0}', space=vmem, size = 0x4000, scoped, tag = 'input window, operand 1']
    #allocation6 [shape = 's32[2]{0}', space=sflag, size = 0x8, scoped, tag = 'scoped memory for tpu_custom_call.1']
    #allocation7 [shape = 'u8[16384]{0}', space=vmem, size = 0x4000, scoped, tag = 'input window, operand 2']
    #allocation8 [shape = 'u8[16384]{0}', space=vmem, size = 0x4000, scoped, tag = 'input window, operand 3, single buffered']
    #allocation9 [shape = 's32[1]{0}', space=sflag, size = 0x4, scoped, tag = 'scoped memory for tpu_custom_call.1']
    #allocation10 [shape = 'u8[1024]{0}', space=vmem, size = 0x400, scoped, tag = 'input window, operand 4, single buffered']
    #allocation11 [shape = 'u8[8192]{0}', space=vmem, size = 0x2000, scoped, tag = 'input window, operand 5']
    #allocation12 [shape = 's32[2]{0}', space=sflag, size = 0x8, scoped, tag = 'scoped memory for tpu_custom_call.1']
    #allocation13 [shape = 'u8[8192]{0}', space=vmem, size = 0x2000, scoped, tag = 'input window, operand 6']
    #allocation14 [shape = 'u8[16384]{0}', space=vmem, size = 0x4000, scoped, tag = 'output window, operand 0']
    #allocation15 [shape = 'u8[16384]{0}', space=vmem, size = 0x4000, scoped, tag = 'output window, operand 1']
    #allocation16 [shape = 's32[2]{0}', space=sflag, size = 0x8, scoped, tag = 'scoped memory for tpu_custom_call.1']
    #allocation17 [shape = 'u8[16384]{0}', space=vmem, size = 0x4000, scoped, tag = 'output window, operand 2']
    #allocation18 [shape = 'u8[16384]{0}', space=vmem, size = 0x4000, scoped, tag = 'output window, operand 3']
    #allocation19 [shape = 's32[2]{0}', space=sflag, size = 0x8, scoped, tag = 'scoped memory for tpu_custom_call.1']
    %16 = vsyncpa [#allocation3], 0
    %s17 = scalar_lea.sflag [#allocation3], 1
    %18 = vsyncpa %s17, 0
    %19 = vsyncpa [#allocation6], 0
    %s20 = scalar_lea.sflag [#allocation6], 1
    %21 = vsyncpa %s20, 0
    %22 = vsyncpa [#allocation9], 0
    %23 = vsyncpa [#allocation12], 0
    %s24 = scalar_lea.sflag [#allocation12], 1
    %25 = vsyncpa %s24, 0
    %26 = vsyncpa [#allocation4], 0
    %s27 = scalar_lea.sflag [#allocation4], 1
    %28 = vsyncpa %s27, 0
    %29 = vsyncpa [#allocation16], 0
    %s30 = scalar_lea.sflag [#allocation16], 1
    %31 = vsyncpa %s30, 0
    %32 = vsyncpa [#allocation19], 0
    %s33 = scalar_lea.sflag [#allocation19], 1
    %34 = vsyncpa %s33, 0
    loop: start=0, step=1, limit=6
    $region2: #{tpu_custom_call.1} parent=1 // loop_pre_header
      _
    $region3: #{tpu_custom_call.1} parent=1 // loop_header
      %s36 = sphi 0, %s40
      %p37 = scmp.ge.s32.totalorder %s36, 6
      %s43 = sphi 0, %s55
      %s44 = sphi 0, %s51
      %s45 = sphi 0, %s43
      %s46 = sphi 0, %s44
      %s47 = sphi 0, %s45
      %s48 = sphi 0, %s46
      %s60 = sphi 0, %s62
      %s63 = sphi 0, %s60
      %s64 = sphi 0, %s63
      %s80 = sphi 0, %s64
      %s88 = sphi 0, %s90
      %s91 = sphi 0, %s88
      %s92 = sphi 0, %s91
      %s108 = sphi 0, %s92
      %s116 = sphi 0, %s118
      %s119 = sphi 0, %s116
      %s120 = sphi 0, %s119
      %s136 = sphi 0, %s120
      %s140 = sphi 0, %s140
      %s142 = sphi 0, %s140
      %s143 = sphi 0, %s142
      %s157 = sphi 0, %s143
      %s161 = sphi 0, %s161
      %s163 = sphi 0, %s161
      %s164 = sphi 0, %s163
      %s178 = sphi 0, %s164
      %s184 = sphi 0, %s186
      %s187 = sphi 0, %s184
      %s188 = sphi 0, %s187
      %s204 = sphi 0, %s188
      %s210 = sphi 0, %s212
      %s213 = sphi 0, %s210
      %s214 = sphi 0, %s213
      %s230 = sphi 0, %s214
      %s238 = sphi 0, %s240
      %s241 = sphi 0, %s238
      %s242 = sphi 0, %s241
      %s258 = sphi 0, %s242
      %s266 = sphi 0, %s268
      %s269 = sphi 0, %s266
      %s270 = sphi 0, %s269
      %s286 = sphi 0, %s270
      %s294 = sphi 0, %s296
      %s297 = sphi 0, %s294
      %s298 = sphi 0, %s297
      %s314 = sphi 0, %s298
      %s322 = sphi 0, %s324
      %s325 = sphi 0, %s322
      %s326 = sphi 0, %s325
      %s342 = sphi 0, %s326
    $region4: #{tpu_custom_call.1} parent=1 // loop_header_branch
      %39 = sbr.rel (%p37) target = $region8
    $region5: #{tpu_custom_call.1} parent=1 // loop_body
      %s41 = ssub.s32 %s36, 1
      %s42 = ssub.s32 %s36, 2
      %s49 = sadd.s32 1, %s44
      %p50 = scmp.ge.s32.totalorder %s49, 2
      %s51 = scalar_select %p50, 0, %s49
      %s52 = sadd.s32 1, %s43
      %s53 = scalar_select %p50, %s52, %s43
      %p54 = scmp.ge.s32.totalorder %s53, 2
      %s55 = scalar_select %p54, 0, %s53
      %s56 = ssub.s32 %s43, %s55
      %s57 = ssub.s32 %s44, %s51
      %s58 = sor.u32 %s56, %s57
      %p59 = scmp.eq.s32.totalorder %s58, 0
      %s61 = sadd.s32 %s60, 1
      %s62 = scalar_select %p59, %s60, %s61
      %p65 = pneg %p59
      %p66 = scmp.eq.s32.totalorder %s36, 3
      %p67 = por %p65, %p66
      %p68 = scmp.ne.s32.totalorder %s60, %s63
      %p69 = scmp.eq.s32.totalorder %s36, 0
      %p70 = por %p68, %p69
      %p71 = scmp.ne.s32.totalorder %s60, %s63
      %p72 = scmp.eq.s32.totalorder %s41, 3
      %p73 = por %p71, %p72
      %p74 = scmp.ne.s32.totalorder %s63, %s64
      %p75 = scmp.eq.s32.totalorder %s41, 0
      %p76 = por %p74, %p75
      %p77 = scmp.ne.s32.totalorder %s63, %s64
      %p78 = scmp.eq.s32.totalorder %s42, 3
      %p79 = por %p77, %p78
      %p81 = scmp.ne.s32.totalorder %s64, %s80
      %p82 = scmp.eq.s32.totalorder %s42, 0
      %p83 = por %p81, %p82
      %s84 = ssub.s32 %s43, %s55
      %s85 = ssub.s32 %s44, %s51
      %s86 = sor.u32 %s84, %s85
      %p87 = scmp.eq.s32.totalorder %s86, 0
      %s89 = sadd.s32 %s88, 1
      %s90 = scalar_select %p87, %s88, %s89
      %p93 = pneg %p87
      %p94 = scmp.eq.s32.totalorder %s36, 3
      %p95 = por %p93, %p94
      %p96 = scmp.ne.s32.totalorder %s88, %s91
      %p97 = scmp.eq.s32.totalorder %s36, 0
      %p98 = por %p96, %p97
      %p99 = scmp.ne.s32.totalorder %s88, %s91
      %p100 = scmp.eq.s32.totalorder %s41, 3
      %p101 = por %p99, %p100
      %p102 = scmp.ne.s32.totalorder %s91, %s92
      %p103 = scmp.eq.s32.totalorder %s41, 0
      %p104 = por %p102, %p103
      %p105 = scmp.ne.s32.totalorder %s91, %s92
      %p106 = scmp.eq.s32.totalorder %s42, 3
      %p107 = por %p105, %p106
      %p109 = scmp.ne.s32.totalorder %s92, %s108
      %p110 = scmp.eq.s32.totalorder %s42, 0
      %p111 = por %p109, %p110
      %s112 = ssub.s32 %s43, %s55
      %s113 = ssub.s32 %s44, %s51
      %s114 = sor.u32 %s112, %s113
      %p115 = scmp.eq.s32.totalorder %s114, 0
      %s117 = sadd.s32 %s116, 1
      %s118 = scalar_select %p115, %s116, %s117
      %p121 = pneg %p115
      %p122 = scmp.eq.s32.totalorder %s36, 3
      %p123 = por %p121, %p122
      %p124 = scmp.ne.s32.totalorder %s116, %s119
      %p125 = scmp.eq.s32.totalorder %s36, 0
      %p126 = por %p124, %p125
      %p127 = scmp.ne.s32.totalorder %s116, %s119
      %p128 = scmp.eq.s32.totalorder %s41, 3
      %p129 = por %p127, %p128
      %p130 = scmp.ne.s32.totalorder %s119, %s120
      %p131 = scmp.eq.s32.totalorder %s41, 0
      %p132 = por %p130, %p131
      %p133 = scmp.ne.s32.totalorder %s119, %s120
      %p134 = scmp.eq.s32.totalorder %s42, 3
      %p135 = por %p133, %p134
      %p137 = scmp.ne.s32.totalorder %s120, %s136
      %p138 = scmp.eq.s32.totalorder %s42, 0
      %p139 = por %p137, %p138
      %s141 = sadd.s32 %s140, 1
      %p144 = scmp.eq.s32.totalorder %s36, 3
      %p145 = scmp.ne.s32.totalorder %s140, %s142
      %p146 = scmp.eq.s32.totalorder %s36, 0
      %p147 = por %p145, %p146
      %p148 = scmp.ne.s32.totalorder %s140, %s142
      %p149 = scmp.eq.s32.totalorder %s41, 3
      %p150 = por %p148, %p149
      %p151 = scmp.ne.s32.totalorder %s142, %s143
      %p152 = scmp.eq.s32.totalorder %s41, 0
      %p153 = por %p151, %p152
      %p154 = scmp.ne.s32.totalorder %s142, %s143
      %p155 = scmp.eq.s32.totalorder %s42, 3
      %p156 = por %p154, %p155
      %p158 = scmp.ne.s32.totalorder %s143, %s157
      %p159 = scmp.eq.s32.totalorder %s42, 0
      %p160 = por %p158, %p159
      %s162 = sadd.s32 %s161, 1
      %p165 = scmp.eq.s32.totalorder %s36, 3
      %p166 = scmp.ne.s32.totalorder %s161, %s163
      %p167 = scmp.eq.s32.totalorder %s36, 0
      %p168 = por %p166, %p167
      %p169 = scmp.ne.s32.totalorder %s161, %s163
      %p170 = scmp.eq.s32.totalorder %s41, 3
      %p171 = por %p169, %p170
      %p172 = scmp.ne.s32.totalorder %s163, %s164
      %p173 = scmp.eq.s32.totalorder %s41, 0
      %p174 = por %p172, %p173
      %p175 = scmp.ne.s32.totalorder %s163, %s164
      %p176 = scmp.eq.s32.totalorder %s42, 3
      %p177 = por %p175, %p176
      %p179 = scmp.ne.s32.totalorder %s164, %s178
      %p180 = scmp.eq.s32.totalorder %s42, 0
      %p181 = por %p179, %p180
      %s182 = ssub.s32 %s43, %s55
      %p183 = scmp.eq.s32.totalorder %s182, 0
      %s185 = sadd.s32 %s184, 1
      %s186 = scalar_select %p183, %s184, %s185
      %p189 = pneg %p183
      %p190 = scmp.eq.s32.totalorder %s36, 3
      %p191 = por %p189, %p190
      %p192 = scmp.ne.s32.totalorder %s184, %s187
      %p193 = scmp.eq.s32.totalorder %s36, 0
      %p194 = por %p192, %p193
      %p195 = scmp.ne.s32.totalorder %s184, %s187
      %p196 = scmp.eq.s32.totalorder %s41, 3
      %p197 = por %p195, %p196
      %p198 = scmp.ne.s32.totalorder %s187, %s188
      %p199 = scmp.eq.s32.totalorder %s41, 0
      %p200 = por %p198, %p199
      %p201 = scmp.ne.s32.totalorder %s187, %s188
      %p202 = scmp.eq.s32.totalorder %s42, 3
      %p203 = por %p201, %p202
      %p205 = scmp.ne.s32.totalorder %s188, %s204
      %p206 = scmp.eq.s32.totalorder %s42, 0
      %p207 = por %p205, %p206
      %s208 = ssub.s32 %s43, %s55
      %p209 = scmp.eq.s32.totalorder %s208, 0
      %s211 = sadd.s32 %s210, 1
      %s212 = scalar_select %p209, %s210, %s211
      %p215 = pneg %p209
      %p216 = scmp.eq.s32.totalorder %s36, 3
      %p217 = por %p215, %p216
      %p218 = scmp.ne.s32.totalorder %s210, %s213
      %p219 = scmp.eq.s32.totalorder %s36, 0
      %p220 = por %p218, %p219
      %p221 = scmp.ne.s32.totalorder %s210, %s213
      %p222 = scmp.eq.s32.totalorder %s41, 3
      %p223 = por %p221, %p222
      %p224 = scmp.ne.s32.totalorder %s213, %s214
      %p225 = scmp.eq.s32.totalorder %s41, 0
      %p226 = por %p224, %p225
      %p227 = scmp.ne.s32.totalorder %s213, %s214
      %p228 = scmp.eq.s32.totalorder %s42, 3
      %p229 = por %p227, %p228
      %p231 = scmp.ne.s32.totalorder %s214, %s230
      %p232 = scmp.eq.s32.totalorder %s42, 0
      %p233 = por %p231, %p232
      %s234 = ssub.s32 %s43, %s55
      %s235 = ssub.s32 %s44, %s51
      %s236 = sor.u32 %s234, %s235
      %p237 = scmp.eq.s32.totalorder %s236, 0
      %s239 = sadd.s32 %s238, 1
      %s240 = scalar_select %p237, %s238, %s239
      %p243 = pneg %p237
      %p244 = scmp.eq.s32.totalorder %s36, 3
      %p245 = por %p243, %p244
      %p246 = scmp.ne.s32.totalorder %s238, %s241
      %p247 = scmp.eq.s32.totalorder %s36, 0
      %p248 = por %p246, %p247
      %p249 = scmp.ne.s32.totalorder %s238, %s241
      %p250 = scmp.eq.s32.totalorder %s41, 3
      %p251 = por %p249, %p250
      %p252 = scmp.ne.s32.totalorder %s241, %s242
      %p253 = scmp.eq.s32.totalorder %s41, 0
      %p254 = por %p252, %p253
      %p255 = scmp.ne.s32.totalorder %s241, %s242
      %p256 = scmp.eq.s32.totalorder %s42, 3
      %p257 = por %p255, %p256
      %p259 = scmp.ne.s32.totalorder %s242, %s258
      %p260 = scmp.eq.s32.totalorder %s42, 0
      %p261 = por %p259, %p260
      %s262 = ssub.s32 %s43, %s55
      %s263 = ssub.s32 %s44, %s51
      %s264 = sor.u32 %s262, %s263
      %p265 = scmp.eq.s32.totalorder %s264, 0
      %s267 = sadd.s32 %s266, 1
      %s268 = scalar_select %p265, %s266, %s267
      %p271 = pneg %p265
      %p272 = scmp.eq.s32.totalorder %s36, 3
      %p273 = por %p271, %p272
      %p274 = scmp.ne.s32.totalorder %s266, %s269
      %p275 = scmp.eq.s32.totalorder %s36, 0
      %p276 = por %p274, %p275
      %p277 = scmp.ne.s32.totalorder %s266, %s269
      %p278 = scmp.eq.s32.totalorder %s41, 3
      %p279 = por %p277, %p278
      %p280 = scmp.ne.s32.totalorder %s269, %s270
      %p281 = scmp.eq.s32.totalorder %s41, 0
      %p282 = por %p280, %p281
      %p283 = scmp.ne.s32.totalorder %s269, %s270
      %p284 = scmp.eq.s32.totalorder %s42, 3
      %p285 = por %p283, %p284
      %p287 = scmp.ne.s32.totalorder %s270, %s286
      %p288 = scmp.eq.s32.totalorder %s42, 0
      %p289 = por %p287, %p288
      %s290 = ssub.s32 %s43, %s55
      %s291 = ssub.s32 %s44, %s51
      %s292 = sor.u32 %s290, %s291
      %p293 = scmp.eq.s32.totalorder %s292, 0
      %s295 = sadd.s32 %s294, 1
      %s296 = scalar_select %p293, %s294, %s295
      %p299 = pneg %p293
      %p300 = scmp.eq.s32.totalorder %s36, 3
      %p301 = por %p299, %p300
      %p302 = scmp.ne.s32.totalorder %s294, %s297
      %p303 = scmp.eq.s32.totalorder %s36, 0
      %p304 = por %p302, %p303
      %p305 = scmp.ne.s32.totalorder %s294, %s297
      %p306 = scmp.eq.s32.totalorder %s41, 3
      %p307 = por %p305, %p306
      %p308 = scmp.ne.s32.totalorder %s297, %s298
      %p309 = scmp.eq.s32.totalorder %s41, 0
      %p310 = por %p308, %p309
      %p311 = scmp.ne.s32.totalorder %s297, %s298
      %p312 = scmp.eq.s32.totalorder %s42, 3
      %p313 = por %p311, %p312
      %p315 = scmp.ne.s32.totalorder %s298, %s314
      %p316 = scmp.eq.s32.totalorder %s42, 0
      %p317 = por %p315, %p316
      %s318 = ssub.s32 %s43, %s55
      %s319 = ssub.s32 %s44, %s51
      %s320 = sor.u32 %s318, %s319
      %p321 = scmp.eq.s32.totalorder %s320, 0
      %s323 = sadd.s32 %s322, 1
      %s324 = scalar_select %p321, %s322, %s323
      %p327 = pneg %p321
      %p328 = scmp.eq.s32.totalorder %s36, 3
      %p329 = por %p327, %p328
      %p330 = scmp.ne.s32.totalorder %s322, %s325
      %p331 = scmp.eq.s32.totalorder %s36, 0
      %p332 = por %p330, %p331
      %p333 = scmp.ne.s32.totalorder %s322, %s325
      %p334 = scmp.eq.s32.totalorder %s41, 3
      %p335 = por %p333, %p334
      %p336 = scmp.ne.s32.totalorder %s325, %s326
      %p337 = scmp.eq.s32.totalorder %s41, 0
      %p338 = por %p336, %p337
      %p339 = scmp.ne.s32.totalorder %s325, %s326
      %p340 = scmp.eq.s32.totalorder %s42, 3
      %p341 = por %p339, %p340
      %p343 = scmp.ne.s32.totalorder %s326, %s342
      %p344 = scmp.eq.s32.totalorder %s42, 0
      %p345 = por %p343, %p344
      %p346 = scmp.le.s32.totalorder 1, %s36
      %p347 = scmp.lt.s32.totalorder %s36, 5
      %p348 = pnand %p346, %p347
      %p349 = pneg %p348
      // Predicated region
      $region9: #{tpu_custom_call.1} parent=5 // pred_check
        _
      $region10: #{tpu_custom_call.1} parent=5 // pred_check_branch
        %351 = sbr.rel (%p348) target = $region12
      $region11: #{tpu_custom_call.1} parent=5 // pred_region
        %s352 = ssub.s32 %s36, 1
        // Predicated region
        $region13: #{tpu_custom_call.1} parent=11 // pred_check
          %p353 = pneg %p153
        $region14: #{tpu_custom_call.1} parent=11 // pred_check_branch
          %355 = sbr.rel (%p353) target = $region16
        $region15: #{tpu_custom_call.1} parent=11 // pred_region
          %s357 = ssub.s32 512, 512
          %358 = vsyncadd [#allocation9], %s357
          %s359 = sshll.u32 [#allocation8], 4
          %s360 = int_to_ptr.vmem [resolvable:$true] %s359
          %365 = dma.hbm_to_vmem [thread:$0]  %s3, 512, %s360, [#allocation9], 128, 128, 8
        $region16: #{tpu_custom_call.1} parent=11 // pred_fallthru
          _
        // Predicated region
        $region17: #{tpu_custom_call.1} parent=11 // pred_check
          %p366 = pneg %p174
        $region18: #{tpu_custom_call.1} parent=11 // pred_check_branch
          %368 = sbr.rel (%p366) target = $region20
        $region19: #{tpu_custom_call.1} parent=11 // pred_region
          %s370 = ssub.s32 32, 32
          %371 = vsyncadd [#allocation9], %s370
          %s373 = sshll.u32 [#allocation10], 4
          %s374 = int_to_ptr.vmem [resolvable:$true] %s373
          %376 = dma.hbm_to_vmem [thread:$0]  %s4, 32, %s374, [#allocation9]
        $region20: #{tpu_custom_call.1} parent=11 // pred_fallthru
          _
      $region12: #{tpu_custom_call.1} parent=5 // pred_fallthru
        _
      %p377 = scmp.lt.s32.totalorder %s36, 4
      // Predicated region
      $region21: #{tpu_custom_call.1} parent=5 // pred_check
        %p378 = pneg %p377
      $region22: #{tpu_custom_call.1} parent=5 // pred_check_branch
        %380 = sbr.rel (%p378) target = $region24
      $region23: #{tpu_custom_call.1} parent=5 // pred_region
        // Predicated region
        $region25: #{tpu_custom_call.1} parent=23 // pred_check
          %p381 = pneg %p70
        $region26: #{tpu_custom_call.1} parent=23 // pred_check_branch
          %383 = sbr.rel (%p381) target = $region28
        $region27: #{tpu_custom_call.1} parent=23 // pred_region
          %s384 = sand.u32 %s60, 1
          %s385 = scalar_lea.sflag [#allocation3], %s384
          %s386 = sand.u32 %s60, 1
          %s387 = smul.addr %s386, 8
          %s388 = scalar_lea.vmem [#allocation2], %s387
          %s389 = smul.u32 2, %s44
          %s391 = ssub.s32 128, 128
          %392 = vsyncadd %s385, %s391
          %s393 = smul.addr %s43, 4
          %s394 = sadd.s32 %s389, %s393
          %s395 = smul.addr %s394, 64
          %s396 = scalar_lea.hbm %s0, %s395
          %s397 = sshll.u32 %s388, 4
          %s398 = int_to_ptr.vmem [resolvable:$true] %s397
          %403 = dma.hbm_to_vmem [thread:$0]  %s396, 128, %s398, %s385, 64, 64, 4
        $region28: #{tpu_custom_call.1} parent=23 // pred_fallthru
          _
        // Predicated region
        $region29: #{tpu_custom_call.1} parent=23 // pred_check
          %p404 = pneg %p98
        $region30: #{tpu_custom_call.1} parent=23 // pred_check_branch
          %406 = sbr.rel (%p404) target = $region32
        $region31: #{tpu_custom_call.1} parent=23 // pred_region
          %s407 = sand.u32 %s36, 1
          %s408 = scalar_lea.sflag [#allocation6], %s407
          %s409 = sand.u32 %s88, 1
          %s410 = smul.addr %s409, 16
          %s411 = scalar_lea.vmem [#allocation5], %s410
          %s412 = smul.u32 2, %s44
          %s414 = ssub.s32 256, 256
          %415 = vsyncadd %s408, %s414
          %s416 = smul.addr %s43, 4
          %s417 = sadd.s32 %s412, %s416
          %s418 = smul.addr %s417, 128
          %s419 = scalar_lea.hbm %s1, %s418
          %s420 = sshll.u32 %s411, 4
          %s421 = int_to_ptr.vmem [resolvable:$true] %s420
          %426 = dma.hbm_to_vmem [thread:$0]  %s419, 256, %s421, %s408, 128, 128, 8
        $region32: #{tpu_custom_call.1} parent=23 // pred_fallthru
          _
        // Predicated region
        $region33: #{tpu_custom_call.1} parent=23 // pred_check
          %p427 = pneg %p126
        $region34: #{tpu_custom_call.1} parent=23 // pred_check_branch
          %429 = sbr.rel (%p427) target = $region36
        $region35: #{tpu_custom_call.1} parent=23 // pred_region
          %s430 = sand.u32 %s36, 1
          %s431 = scalar_lea.sflag [#allocation6], %s430
          %s432 = sand.u32 %s116, 1
          %s433 = smul.addr %s432, 16
          %s434 = scalar_lea.vmem [#allocation7], %s433
          %s435 = smul.u32 2, %s44
          %s437 = ssub.s32 256, 256
          %438 = vsyncadd %s431, %s437
          %s439 = smul.addr %s43, 4
          %s440 = sadd.s32 %s435, %s439
          %s441 = smul.addr %s440, 128
          %s442 = scalar_lea.hbm %s2, %s441
          %s443 = sshll.u32 %s434, 4
          %s444 = int_to_ptr.vmem [resolvable:$true] %s443
          %449 = dma.hbm_to_vmem [thread:$0]  %s442, 256, %s444, %s431, 128, 128, 8
        $region36: #{tpu_custom_call.1} parent=23 // pred_fallthru
          _
        // Predicated region
        $region37: #{tpu_custom_call.1} parent=23 // pred_check
          %p450 = pneg %p194
        $region38: #{tpu_custom_call.1} parent=23 // pred_check_branch
          %452 = sbr.rel (%p450) target = $region40
        $region39: #{tpu_custom_call.1} parent=23 // pred_region
          %s453 = sand.u32 %s36, 1
          %s454 = scalar_lea.sflag [#allocation12], %s453
          %s455 = sand.u32 %s184, 1
          %s456 = smul.addr %s455, 8
          %s457 = scalar_lea.vmem [#allocation11], %s456
          %s459 = ssub.s32 128, 128
          %460 = vsyncadd %s454, %s459
          %s461 = smul.addr %s43, 128
          %s462 = scalar_lea.hbm %s5, %s461
          %s464 = sshll.u32 %s457, 4
          %s465 = int_to_ptr.vmem [resolvable:$true] %s464
          %467 = dma.hbm_to_vmem [thread:$0]  %s462, 128, %s465, %s454
        $region40: #{tpu_custom_call.1} parent=23 // pred_fallthru
          _
        // Predicated region
        $region41: #{tpu_custom_call.1} parent=23 // pred_check
          %p468 = pneg %p220
        $region42: #{tpu_custom_call.1} parent=23 // pred_check_branch
          %470 = sbr.rel (%p468) target = $region44
        $region43: #{tpu_custom_call.1} parent=23 // pred_region
          %s471 = sand.u32 %s36, 1
          %s472 = scalar_lea.sflag [#allocation12], %s471
          %s473 = sand.u32 %s210, 1
          %s474 = smul.addr %s473, 8
          %s475 = scalar_lea.vmem [#allocation13], %s474
          %s477 = ssub.s32 128, 128
          %478 = vsyncadd %s472, %s477
          %s479 = smul.addr %s43, 128
          %s480 = scalar_lea.hbm %s6, %s479
          %s482 = sshll.u32 %s475, 4
          %s483 = int_to_ptr.vmem [resolvable:$true] %s482
          %485 = dma.hbm_to_vmem [thread:$0]  %s480, 128, %s483, %s472
        $region44: #{tpu_custom_call.1} parent=23 // pred_fallthru
          _
      $region24: #{tpu_custom_call.1} parent=5 // pred_fallthru
        _
      %p486 = scmp.le.s32.totalorder 1, %s36
      %p487 = scmp.lt.s32.totalorder %s36, 5
      %p488 = pnand %p486, %p487
      %p489 = pneg %p488
      // Predicated region
      $region45: #{tpu_custom_call.1} parent=5 // pred_check
        _
      $region46: #{tpu_custom_call.1} parent=5 // pred_check_branch
        %491 = sbr.rel (%p488) target = $region48
      $region47: #{tpu_custom_call.1} parent=5 // pred_region
        %s492 = ssub.s32 %s36, 1
        %s493 = sand.u32 %s63, 1
        %s494 = scalar_lea.sflag [#allocation3], %s493
        %s495 = sand.u32 %s63, 1
        %s496 = smul.addr %s495, 8
        %s497 = scalar_lea.vmem [#allocation2], %s496
        // Predicated region
        $region49: #{tpu_custom_call.1} parent=47 // pred_check
          %p498 = pneg %p76
        $region50: #{tpu_custom_call.1} parent=47 // pred_check_branch
          %500 = sbr.rel (%p498) target = $region52
        $region51: #{tpu_custom_call.1} parent=47 // pred_region
          %501 = dma.done %s494, 128
        $region52: #{tpu_custom_call.1} parent=47 // pred_fallthru
          _
        %s502 = sand.u32 %s41, 1
        %s503 = scalar_lea.sflag [#allocation6], %s502
        %s504 = sand.u32 %s91, 1
        %s505 = smul.addr %s504, 16
        %s506 = scalar_lea.vmem [#allocation5], %s505
        // Predicated region
        $region53: #{tpu_custom_call.1} parent=47 // pred_check
          %p507 = pneg %p104
        $region54: #{tpu_custom_call.1} parent=47 // pred_check_branch
          %509 = sbr.rel (%p507) target = $region56
        $region55: #{tpu_custom_call.1} parent=47 // pred_region
          %510 = dma.done %s503, 256
        $region56: #{tpu_custom_call.1} parent=47 // pred_fallthru
          _
        %s511 = sand.u32 %s41, 1
        %s512 = scalar_lea.sflag [#allocation6], %s511
        %s513 = sand.u32 %s119, 1
        %s514 = smul.addr %s513, 16
        %s515 = scalar_lea.vmem [#allocation7], %s514
        // Predicated region
        $region57: #{tpu_custom_call.1} parent=47 // pred_check
          %p516 = pneg %p132
        $region58: #{tpu_custom_call.1} parent=47 // pred_check_branch
          %518 = sbr.rel (%p516) target = $region60
        $region59: #{tpu_custom_call.1} parent=47 // pred_region
          %519 = dma.done %s512, 256
        $region60: #{tpu_custom_call.1} parent=47 // pred_fallthru
          _
        // Predicated region
        $region61: #{tpu_custom_call.1} parent=47 // pred_check
          %p520 = pneg %p153
        $region62: #{tpu_custom_call.1} parent=47 // pred_check_branch
          %522 = sbr.rel (%p520) target = $region64
        $region63: #{tpu_custom_call.1} parent=47 // pred_region
          %523 = dma.done [#allocation9], 512
        $region64: #{tpu_custom_call.1} parent=47 // pred_fallthru
          _
        // Predicated region
        $region65: #{tpu_custom_call.1} parent=47 // pred_check
          %p524 = pneg %p174
        $region66: #{tpu_custom_call.1} parent=47 // pred_check_branch
          %526 = sbr.rel (%p524) target = $region68
        $region67: #{tpu_custom_call.1} parent=47 // pred_region
          %527 = dma.done [#allocation9], 32
        $region68: #{tpu_custom_call.1} parent=47 // pred_fallthru
          _
        %s528 = sand.u32 %s41, 1
        %s529 = scalar_lea.sflag [#allocation12], %s528
        %s530 = sand.u32 %s187, 1
        %s531 = smul.addr %s530, 8
        %s532 = scalar_lea.vmem [#allocation11], %s531
        // Predicated region
        $region69: #{tpu_custom_call.1} parent=47 // pred_check
          %p533 = pneg %p200
        $region70: #{tpu_custom_call.1} parent=47 // pred_check_branch
          %535 = sbr.rel (%p533) target = $region72
        $region71: #{tpu_custom_call.1} parent=47 // pred_region
          %536 = dma.done %s529, 128
        $region72: #{tpu_custom_call.1} parent=47 // pred_fallthru
          _
        %s537 = sand.u32 %s41, 1
        %s538 = scalar_lea.sflag [#allocation12], %s537
        %s539 = sand.u32 %s213, 1
        %s540 = smul.addr %s539, 8
        %s541 = scalar_lea.vmem [#allocation13], %s540
        // Predicated region
        $region73: #{tpu_custom_call.1} parent=47 // pred_check
          %p542 = pneg %p226
        $region74: #{tpu_custom_call.1} parent=47 // pred_check_branch
          %544 = sbr.rel (%p542) target = $region76
        $region75: #{tpu_custom_call.1} parent=47 // pred_region
          %545 = dma.done %s538, 128
        $region76: #{tpu_custom_call.1} parent=47 // pred_fallthru
          _
        %s546 = sand.u32 %s63, 1
        %s547 = scalar_lea.sflag [#allocation3], %s546
        %s548 = sand.u32 %s63, 1
        %s549 = smul.addr %s548, 8
        %s550 = scalar_lea.vmem [#allocation2], %s549
        %p551 = pneg %p76
        %p552 = pneg %p73
        %s553 = sand.u32 %s41, 1
        %s554 = scalar_lea.sflag [#allocation6], %s553
        %s555 = sand.u32 %s91, 1
        %s556 = smul.addr %s555, 16
        %s557 = scalar_lea.vmem [#allocation5], %s556
        %p558 = pneg %p104
        %p559 = pneg %p101
        %s560 = sand.u32 %s41, 1
        %s561 = scalar_lea.sflag [#allocation6], %s560
        %s562 = sand.u32 %s119, 1
        %s563 = smul.addr %s562, 16
        %s564 = scalar_lea.vmem [#allocation7], %s563
        %p565 = pneg %p132
        %p566 = pneg %p129
        %p567 = pneg %p153
        %p568 = pneg %p150
        %p569 = pneg %p174
        %p570 = pneg %p171
        %s571 = sand.u32 %s41, 1
        %s572 = scalar_lea.sflag [#allocation12], %s571
        %s573 = sand.u32 %s187, 1
        %s574 = smul.addr %s573, 8
        %s575 = scalar_lea.vmem [#allocation11], %s574
        %p576 = pneg %p200
        %p577 = pneg %p197
        %s578 = sand.u32 %s41, 1
        %s579 = scalar_lea.sflag [#allocation12], %s578
        %s580 = sand.u32 %s213, 1
        %s581 = smul.addr %s580, 8
        %s582 = scalar_lea.vmem [#allocation13], %s581
        %p583 = pneg %p226
        %p584 = pneg %p223
        %p585 = pneg %p254
        %p586 = pneg %p251
        %s587 = sand.u32 %s241, 1
        %s588 = scalar_lea.sflag [#allocation4], %s587
        %s589 = sand.u32 %s241, 1
        %s590 = smul.addr %s589, 16
        %s591 = scalar_lea.vmem [#allocation14], %s590
        %p592 = pneg %p282
        %p593 = pneg %p279
        %s594 = sand.u32 %s41, 1
        %s595 = scalar_lea.sflag [#allocation16], %s594
        %s596 = sand.u32 %s269, 1
        %s597 = smul.addr %s596, 16
        %s598 = scalar_lea.vmem [#allocation15], %s597
        %p599 = pneg %p310
        %p600 = pneg %p307
        %s601 = sand.u32 %s41, 1
        %s602 = scalar_lea.sflag [#allocation16], %s601
        %s603 = sand.u32 %s297, 1
        %s604 = smul.addr %s603, 16
        %s605 = scalar_lea.vmem [#allocation17], %s604
        %p606 = pneg %p338
        %p607 = pneg %p335
        %s608 = sand.u32 %s325, 1
        %s609 = scalar_lea.sflag [#allocation19], %s608
        %s610 = sand.u32 %s325, 1
        %s611 = smul.addr %s610, 16
        %s612 = scalar_lea.vmem [#allocation18], %s611
        %s613 = smul.u32 2, %s46
        %s614 = smul.u32 2, %s46
        %s615 = smul.u32 2, %s46
        %s616 = smul.u32 2, %s46
        %s617 = smul.u32 2, %s46
        %s618 = smul.u32 2, %s46
        %s619 = smul.u32 2, %s46
        %v621 = vld [vmem:[%s497] sm:$0xf]
        %v622 = vld [vmem:[%s497 + $0x4] sm:$0xf]
        %v623 = vld [vmem:[#allocation8] sm:$0xff]
        %v624 = vld [vmem:[#allocation8 + $0x8] sm:$0xff]
        %v625 = vld [vmem:[#allocation8 + $0x10] sm:$0xff]
        %v626 = vld [vmem:[#allocation8 + $0x18] sm:$0xff]
        %v627 = vld [vmem:[#allocation10] sm:$0x3]
        %v629 = vlaneseq
        %v630 = vshrl.u32 %v629, 7
        %v631 = vsub.s32 0, %v630
        %v632 = vrot.slane %v627, %v631
        %v633 = vlaneseq
        %v634 = vshrl.u32 %v633, 7
        %v635 = vsub.s32 1, %v634
        %v636 = vrot.slane %v627, %v635
        %v641 = vunpack.c.l.b16 %v621
        %v642 = vunpack.c.l.b16 %v622
        %v643 = vpack.c.b16 %v642, %v641
        %v648 = vunpack.c.l.b16 %v623
        %v649 = vunpack.c.h.b16 %v623
        %v650 = vunpack.c.l.b16 %v624
        %v651 = vunpack.c.h.b16 %v624
        %v652 = vunpack.c.l.b16 %v625
        %v653 = vunpack.c.h.b16 %v625
        %v654 = vunpack.c.l.b16 %v626
        %v655 = vunpack.c.h.b16 %v626
        %v656 = vpack.c.b16 %v650, %v648
        %v657 = vpack.c.b16 %v651, %v649
        %v658 = vpack.c.b16 %v654, %v652
        %v659 = vpack.c.b16 %v655, %v653
        %vm664 = vcmask 261120
        %v666 = vsel %vm664, %v643, 0
        %668 = vmatprep.subr.bf16.mxu0 %v657
        %669 = vmatpush1.bf16.msra.mxu0 %v656
        %670 = vmatprep.subr.bf16.mxu0 %v659
        %671 = vmatpush1.bf16.msra.mxu0 %v658
        %672 = vmatprep.subr.bf16.mxu0 0
        %673 = vmatpush1.bf16.msra.mxu0 0
        %674 = vmatprep.subr.bf16.mxu0 0
        %675 = vmatpush1.bf16.msra.mxu0 0
        %676 = vmatprep.subr.bf16.mxu0 0
        %677 = vmatpush1.bf16.msra.mxu0 0
        %678 = vmatprep.subr.bf16.mxu0 0
        %679 = vmatpush1.bf16.msra.mxu0 0
        %680 = vmatprep.subr.bf16.mxu0 0
        %681 = vmatpush1.bf16.msra.mxu0 0
        %682 = vmatprep.subr.bf16.mxu0 0
        %683 = vmatpush1.bf16.msra.mxu0 0
        %684 = vmatprep.subr.bf16.mxu0 0
        %685 = vmatpush1.bf16.msra.mxu0 0
        %686 = vmatprep.subr.bf16.mxu0 0
        %687 = vmatpush1.bf16.msra.mxu0 0
        %688 = vmatprep.subr.bf16.mxu0 0
        %689 = vmatpush1.bf16.msra.mxu0 0
        %690 = vmatprep.subr.bf16.mxu0 0
        %691 = vmatpush1.bf16.msra.mxu0 0
        %692 = vmatprep.subr.bf16.mxu0 0
        %693 = vmatpush1.bf16.msra.mxu0 0
        %694 = vmatprep.subr.bf16.mxu0 0
        %695 = vmatpush1.bf16.msra.mxu0 0
        %696 = vmatprep.subr.bf16.mxu0 0
        %697 = vmatpush1.bf16.msra.mxu0 0
        %698 = vmatprep.subr.bf16.mxu0 0
        %699 = vmatpush1.bf16.msra.mxu0 0
        %700 = vmatprep.mubr.bf16.mxu0 0
        %701 = vmatmul.mubr.bf16.gmra.mrb[0].mxu0 %v666
        %v702 = vpop.f32.mrb[0].mxu0
        %v703 = vadd.f32 %v632, %v702
        %v704 = vpop.f32.mrb[0].mxu0
        %v705 = vadd.f32 %v636, %v704
        %v706 = vpop.f32.mrb[0].mxu0
        %v707 = vadd.f32 %v632, %v706
        %v708 = vpop.f32.mrb[0].mxu0
        %v709 = vadd.f32 %v636, %v708
        %710 = vdwg.mxu0
        %711 = vmax.xlane.f32.xlu0 %v703
        %v712 = vpop.xlane.xlu0 %711
        %713 = vmax.xlane.f32.xlu0 %v707
        %v714 = vpop.xlane.xlu0 %713
        %v715 = vsub.f32 %v703, %v712
        %v716 = vsub.f32 %v707, %v714
        %v717 = vmul.f32 %v715, 1.442695
        %v718 = vpow.pop %v717
        %v719 = vmul.f32 %v716, 1.442695
        %v720 = vpow.pop %v719
        %721 = vadd.xlane.f32.xlu0 %v718
        %v722 = vpop.xlane.xlu0 %721
        %723 = vadd.xlane.f32.xlu0 %v720
        %v724 = vpop.xlane.xlu0 %723
        %725 = vmax.xlane.f32.xlu0 %v705
        %v726 = vpop.xlane.xlu0 %725
        %727 = vmax.xlane.f32.xlu0 %v709
        %v728 = vpop.xlane.xlu0 %727
        %v729 = vsub.f32 %v705, %v726
        %v730 = vsub.f32 %v709, %v728
        %v731 = vmul.f32 %v729, 1.442695
        %v732 = vpow.pop %v731
        %v733 = vmul.f32 %v730, 1.442695
        %v734 = vpow.pop %v733
        %735 = vadd.xlane.f32.xlu0 %v732
        %v736 = vpop.xlane.xlu0 %735
        %737 = vadd.xlane.f32.xlu0 %v734
        %v738 = vpop.xlane.xlu0 %737
        %v739 = vlog2.pop %v736
        %v740 = vmul.f32 %v739, 0.6931472
        %v741 = vlog2.pop %v738
        %v742 = vmul.f32 %v741, 0.6931472
        %v743 = vadd.f32 %v740, %v726
        %v744 = vadd.f32 %v742, %v728
        %v745 = vsub.f32 %v705, %v743
        %v746 = vsub.f32 %v709, %v744
        %747 = vst [vmem:[%s612] sm:$0xff] %v745
        %748 = vst [vmem:[%s612 + $0x8] sm:$0xff] %v746
        %v749 = vmul.f32 %v745, 1.442695
        %v750 = vpow.pop %v749
        %v751 = vmul.f32 %v746, 1.442695
        %v752 = vpow.pop %v751
        %v753 = vrcp.pop %v722
        %v754 = vrcp.pop %v724
        %v755 = vmul.f32 %v750, %v753
        %v756 = vmul.f32 %v752, %v754
        %758 = vset.pattern.permute.xlu0 0
        %759 = vperm.xlu0 %758, %v755
        %v760 = vpop.permute.xlu0 %759
        %763 = vset.pattern.permute.xlu0 0
        %764 = vperm.xlu0 %763, %v756
        %v765 = vpop.permute.xlu0 %764
        %v767 = vmul.f32 %v718, %v760
        %v768 = vmul.f32 %v720, %v765
        %769 = vst [vmem:[%s591] sm:$0xff] %v767
        %770 = vst [vmem:[%s591 + $0x8] sm:$0xff] %v768
        %v771 = vld [vmem:[%s506] sm:$0xff]
        %v772 = vld [vmem:[%s506 + $0x8] sm:$0xff]
        %774 = vset.pattern.permute.xlu0 1
        %775 = vperm.xlu0 %774, %v750
        %v776 = vpop.permute.xlu0 %775
        %779 = vset.pattern.permute.xlu0 1
        %780 = vperm.xlu0 %779, %v752
        %v781 = vpop.permute.xlu0 %780
        %v783 = vmul.f32 %v771, %v776
        %v784 = vmul.f32 %v772, %v781
        %v785 = vld [vmem:[%s515] sm:$0xff]
        %v786 = vld [vmem:[%s515 + $0x8] sm:$0xff]
        %787 = vset.pattern.permute.xlu0 2
        %788 = vperm.xlu0 %787, %v750
        %v789 = vpop.permute.xlu0 %788
        %791 = vset.pattern.permute.xlu0 2
        %792 = vperm.xlu0 %791, %v752
        %v793 = vpop.permute.xlu0 %792
        %v795 = vmul.f32 %v785, %v789
        %v796 = vmul.f32 %v786, %v793
        %v797 = vld [vmem:[%s532] sm:$0xff]
        %vm798 = vcmask 64512
        %v800 = vsel %vm798, %v783, 0
        %v803 = vsel %vm798, %v784, 0
        %805 = vmatprep.subr.mxu0 0.0
        %806 = vmatpush1.msra.mxu0 %v797
        %807 = vmatprep.subr.mxu0 0.0
        %808 = vmatpush1.msra.mxu0 0.0
        %809 = vmatprep.subr.mxu0 0.0
        %810 = vmatpush1.msra.mxu0 0.0
        %811 = vmatprep.subr.mxu0 0.0
        %812 = vmatpush1.msra.mxu0 0.0
        %813 = vmatprep.subr.mxu0 0.0
        %814 = vmatpush1.msra.mxu0 0.0
        %815 = vmatprep.subr.mxu0 0.0
        %816 = vmatpush1.msra.mxu0 0.0
        %817 = vmatprep.subr.mxu0 0.0
        %818 = vmatpush1.msra.mxu0 0.0
        %819 = vmatprep.subr.mxu0 0.0
        %820 = vmatpush1.msra.mxu0 0.0
        %821 = vmatprep.subr.mxu0 0.0
        %822 = vmatpush1.msra.mxu0 0.0
        %823 = vmatprep.subr.mxu0 0.0
        %824 = vmatpush1.msra.mxu0 0.0
        %825 = vmatprep.subr.mxu0 0.0
        %826 = vmatpush1.msra.mxu0 0.0
        %827 = vmatprep.subr.mxu0 0.0
        %828 = vmatpush1.msra.mxu0 0.0
        %829 = vmatprep.subr.mxu0 0.0
        %830 = vmatpush1.msra.mxu0 0.0
        %831 = vmatprep.subr.mxu0 0.0
        %832 = vmatpush1.msra.mxu0 0.0
        %833 = vmatprep.subr.mxu0 0.0
        %834 = vmatpush1.msra.mxu0 0.0
        %835 = vmatprep.subr.mxu0 0.0
        %836 = vmatpush1.msra.mxu0 0.0
        %837 = vmatprep.subr.mxu0 0.0
        %838 = vmatpush1.msra.mxu0 0.0
        %839 = vmatprep.subr.mxu0 0.0
        %840 = vmatpush1.msra.mxu0 0.0
        %841 = vmatprep.subr.mxu0 0.0
        %842 = vmatpush1.msra.mxu0 0.0
        %843 = vmatprep.subr.mxu0 0.0
        %844 = vmatpush1.msra.mxu0 0.0
        %845 = vmatprep.subr.mxu0 0.0
        %846 = vmatpush1.msra.mxu0 0.0
        %847 = vmatprep.subr.mxu0 0.0
        %848 = vmatpush1.msra.mxu0 0.0
        %849 = vmatprep.subr.mxu0 0.0
        %850 = vmatpush1.msra.mxu0 0.0
        %851 = vmatprep.subr.mxu0 0.0
        %852 = vmatpush1.msra.mxu0 0.0
        %853 = vmatprep.subr.mxu0 0.0
        %854 = vmatpush1.msra.mxu0 0.0
        %855 = vmatprep.subr.mxu0 0.0
        %856 = vmatpush1.msra.mxu0 0.0
        %857 = vmatprep.subr.mxu0 0.0
        %858 = vmatpush1.msra.mxu0 0.0
        %859 = vmatprep.subr.mxu0 0.0
        %860 = vmatpush1.msra.mxu0 0.0
        %861 = vmatprep.subr.mxu0 0.0
        %862 = vmatpush1.msra.mxu0 0.0
        %863 = vmatprep.subr.mxu0 0.0
        %864 = vmatpush1.msra.mxu0 0.0
        %865 = vmatprep.subr.mxu0 0.0
        %866 = vmatpush1.msra.mxu0 0.0
        %867 = vmatprep.subr.mxu0 0.0
        %868 = vmatpush1.msra.mxu0 0.0
        %869 = vmatprep.mubr.f32.mxu0 0.0
        %870 = vmatmul.mubr.f32.gmra.mrb[0].mxu0 %v800
        %v871 = vpop.f32.mrb[0].mxu0
        %v872 = vadd.f32 0.0, %v871
        %v873 = vpop.f32.mrb[0].mxu0
        %874 = vmatprep.mubr.f32.mxu0 0.0
        %875 = vmatmul.mubr.f32.gmra.mrb[0].mxu0 %v803
        %v876 = vpop.f32.mrb[0].mxu0
        %v877 = vadd.f32 0.0, %v876
        %v878 = vpop.f32.mrb[0].mxu0
        %879 = vdwg.mxu0
        %880 = vst [vmem:[%s598] sm:$0xff] %v872
        %881 = vst [vmem:[%s598 + $0x8] sm:$0xff] %v877
        %v882 = vld [vmem:[%s541] sm:$0xff]
        %v884 = vsel %vm798, %v795, 0
        %v887 = vsel %vm798, %v796, 0
        %889 = vmatprep.subr.mxu0 0.0
        %890 = vmatpush1.msra.mxu0 %v882
        %891 = vmatprep.subr.mxu0 0.0
        %892 = vmatpush1.msra.mxu0 0.0
        %893 = vmatprep.subr.mxu0 0.0
        %894 = vmatpush1.msra.mxu0 0.0
        %895 = vmatprep.subr.mxu0 0.0
        %896 = vmatpush1.msra.mxu0 0.0
        %897 = vmatprep.subr.mxu0 0.0
        %898 = vmatpush1.msra.mxu0 0.0
        %899 = vmatprep.subr.mxu0 0.0
        %900 = vmatpush1.msra.mxu0 0.0
        %901 = vmatprep.subr.mxu0 0.0
        %902 = vmatpush1.msra.mxu0 0.0
        %903 = vmatprep.subr.mxu0 0.0
        %904 = vmatpush1.msra.mxu0 0.0
        %905 = vmatprep.subr.mxu0 0.0
        %906 = vmatpush1.msra.mxu0 0.0
        %907 = vmatprep.subr.mxu0 0.0
        %908 = vmatpush1.msra.mxu0 0.0
        %909 = vmatprep.subr.mxu0 0.0
        %910 = vmatpush1.msra.mxu0 0.0
        %911 = vmatprep.subr.mxu0 0.0
        %912 = vmatpush1.msra.mxu0 0.0
        %913 = vmatprep.subr.mxu0 0.0
        %914 = vmatpush1.msra.mxu0 0.0
        %915 = vmatprep.subr.mxu0 0.0
        %916 = vmatpush1.msra.mxu0 0.0
        %917 = vmatprep.subr.mxu0 0.0
        %918 = vmatpush1.msra.mxu0 0.0
        %919 = vmatprep.subr.mxu0 0.0
        %920 = vmatpush1.msra.mxu0 0.0
        %921 = vmatprep.subr.mxu0 0.0
        %922 = vmatpush1.msra.mxu0 0.0
        %923 = vmatprep.subr.mxu0 0.0
        %924 = vmatpush1.msra.mxu0 0.0
        %925 = vmatprep.subr.mxu0 0.0
        %926 = vmatpush1.msra.mxu0 0.0
        %927 = vmatprep.subr.mxu0 0.0
        %928 = vmatpush1.msra.mxu0 0.0
        %929 = vmatprep.subr.mxu0 0.0
        %930 = vmatpush1.msra.mxu0 0.0
        %931 = vmatprep.subr.mxu0 0.0
        %932 = vmatpush1.msra.mxu0 0.0
        %933 = vmatprep.subr.mxu0 0.0
        %934 = vmatpush1.msra.mxu0 0.0
        %935 = vmatprep.subr.mxu0 0.0
        %936 = vmatpush1.msra.mxu0 0.0
        %937 = vmatprep.subr.mxu0 0.0
        %938 = vmatpush1.msra.mxu0 0.0
        %939 = vmatprep.subr.mxu0 0.0
        %940 = vmatpush1.msra.mxu0 0.0
        %941 = vmatprep.subr.mxu0 0.0
        %942 = vmatpush1.msra.mxu0 0.0
        %943 = vmatprep.subr.mxu0 0.0
        %944 = vmatpush1.msra.mxu0 0.0
        %945 = vmatprep.subr.mxu0 0.0
        %946 = vmatpush1.msra.mxu0 0.0
        %947 = vmatprep.subr.mxu0 0.0
        %948 = vmatpush1.msra.mxu0 0.0
        %949 = vmatprep.subr.mxu0 0.0
        %950 = vmatpush1.msra.mxu0 0.0
        %951 = vmatprep.subr.mxu0 0.0
        %952 = vmatpush1.msra.mxu0 0.0
        %953 = vmatprep.mubr.f32.mxu0 0.0
        %954 = vmatmul.mubr.f32.gmra.mrb[0].mxu0 %v884
        %v955 = vpop.f32.mrb[0].mxu0
        %v956 = vadd.f32 0.0, %v955
        %v957 = vpop.f32.mrb[0].mxu0
        %958 = vmatprep.mubr.f32.mxu0 0.0
        %959 = vmatmul.mubr.f32.gmra.mrb[0].mxu0 %v887
        %v960 = vpop.f32.mrb[0].mxu0
        %v961 = vadd.f32 0.0, %v960
        %v962 = vpop.f32.mrb[0].mxu0
        %963 = vdwg.mxu0
        %964 = vst [vmem:[%s605] sm:$0xff] %v956
        %965 = vst [vmem:[%s605 + $0x8] sm:$0xff] %v961
        %s966 = sand.u32 %s241, 1
        %s967 = scalar_lea.sflag [#allocation4], %s966
        %s968 = sand.u32 %s241, 1
        %s969 = smul.addr %s968, 16
        %s970 = scalar_lea.vmem [#allocation14], %s969
        %s971 = sand.u32 %s41, 1
        %s972 = scalar_lea.sflag [#allocation16], %s971
        %s973 = sand.u32 %s269, 1
        %s974 = smul.addr %s973, 16
        %s975 = scalar_lea.vmem [#allocation15], %s974
        %s976 = sand.u32 %s41, 1
        %s977 = scalar_lea.sflag [#allocation16], %s976
        %s978 = sand.u32 %s297, 1
        %s979 = smul.addr %s978, 16
        %s980 = scalar_lea.vmem [#allocation17], %s979
        %s981 = sand.u32 %s325, 1
        %s982 = scalar_lea.sflag [#allocation19], %s981
        %s983 = sand.u32 %s325, 1
        %s984 = smul.addr %s983, 16
        %s985 = scalar_lea.vmem [#allocation18], %s984
        // Predicated region
        $region77: #{tpu_custom_call.1} parent=47 // pred_check
          %p986 = pneg %p251
        $region78: #{tpu_custom_call.1} parent=47 // pred_check_branch
          %988 = sbr.rel (%p986) target = $region80
        $region79: #{tpu_custom_call.1} parent=47 // pred_region
          %s989 = smul.u32 2, %s46
          %s991 = ssub.s32 256, 256
          %992 = vsyncadd %s967, %s991
          %s993 = smul.addr %s45, 4
          %s994 = sadd.s32 %s989, %s993
          %s995 = smul.addr %s994, 128
          %s996 = scalar_lea.hbm %s7, %s995
          %s997 = sshll.u32 %s970, 4
          %s998 = int_to_ptr.vmem [resolvable:$true] %s997
          %1003 = dma.vmem_to_hbm [thread:$0]  %s998, 256, %s996, %s967, 128, 128, 8
        $region80: #{tpu_custom_call.1} parent=47 // pred_fallthru
          _
        // Predicated region
        $region81: #{tpu_custom_call.1} parent=47 // pred_check
          %p1004 = pneg %p279
        $region82: #{tpu_custom_call.1} parent=47 // pred_check_branch
          %1006 = sbr.rel (%p1004) target = $region84
        $region83: #{tpu_custom_call.1} parent=47 // pred_region
          %s1007 = smul.u32 2, %s46
          %s1009 = ssub.s32 256, 256
          %1010 = vsyncadd %s972, %s1009
          %s1011 = smul.addr %s45, 4
          %s1012 = sadd.s32 %s1007, %s1011
          %s1013 = smul.addr %s1012, 128
          %s1014 = scalar_lea.hbm %s8, %s1013
          %s1015 = sshll.u32 %s975, 4
          %s1016 = int_to_ptr.vmem [resolvable:$true] %s1015
          %1021 = dma.vmem_to_hbm [thread:$0]  %s1016, 256, %s1014, %s972, 128, 128, 8
        $region84: #{tpu_custom_call.1} parent=47 // pred_fallthru
          _
        // Predicated region
        $region85: #{tpu_custom_call.1} parent=47 // pred_check
          %p1022 = pneg %p307
        $region86: #{tpu_custom_call.1} parent=47 // pred_check_branch
          %1024 = sbr.rel (%p1022) target = $region88
        $region87: #{tpu_custom_call.1} parent=47 // pred_region
          %s1025 = smul.u32 2, %s46
          %s1027 = ssub.s32 256, 256
          %1028 = vsyncadd %s977, %s1027
          %s1029 = smul.addr %s45, 4
          %s1030 = sadd.s32 %s1025, %s1029
          %s1031 = smul.addr %s1030, 128
          %s1032 = scalar_lea.hbm %s9, %s1031
          %s1033 = sshll.u32 %s980, 4
          %s1034 = int_to_ptr.vmem [resolvable:$true] %s1033
          %1039 = dma.vmem_to_hbm [thread:$0]  %s1034, 256, %s1032, %s977, 128, 128, 8
        $region88: #{tpu_custom_call.1} parent=47 // pred_fallthru
          _
        // Predicated region
        $region89: #{tpu_custom_call.1} parent=47 // pred_check
          %p1040 = pneg %p335
        $region90: #{tpu_custom_call.1} parent=47 // pred_check_branch
          %1042 = sbr.rel (%p1040) target = $region92
        $region91: #{tpu_custom_call.1} parent=47 // pred_region
          %s1043 = smul.u32 2, %s46
          %s1045 = ssub.s32 256, 256
          %1046 = vsyncadd %s982, %s1045
          %s1047 = smul.addr %s45, 4
          %s1048 = sadd.s32 %s1043, %s1047
          %s1049 = smul.addr %s1048, 128
          %s1050 = scalar_lea.hbm %s10, %s1049
          %s1051 = sshll.u32 %s985, 4
          %s1052 = int_to_ptr.vmem [resolvable:$true] %s1051
          %1057 = dma.vmem_to_hbm [thread:$0]  %s1052, 256, %s1050, %s982, 128, 128, 8
        $region92: #{tpu_custom_call.1} parent=47 // pred_fallthru
          _
      $region48: #{tpu_custom_call.1} parent=5 // pred_fallthru
        _
      %p1058 = scmp.le.s32.totalorder 2, %s36
      // Predicated region
      $region93: #{tpu_custom_call.1} parent=5 // pred_check
        %p1059 = pneg %p1058
      $region94: #{tpu_custom_call.1} parent=5 // pred_check_branch
        %1061 = sbr.rel (%p1059) target = $region96
      $region95: #{tpu_custom_call.1} parent=5 // pred_region
        %s1062 = ssub.s32 %s36, 2
        // Predicated region
        $region97: #{tpu_custom_call.1} parent=95 // pred_check
          %p1063 = pneg %p257
        $region98: #{tpu_custom_call.1} parent=95 // pred_check_branch
          %1065 = sbr.rel (%p1063) target = $region100
        $region99: #{tpu_custom_call.1} parent=95 // pred_region
          %s1066 = sand.u32 %s242, 1
          %s1067 = scalar_lea.sflag [#allocation4], %s1066
          %s1068 = sand.u32 %s242, 1
          %s1069 = smul.addr %s1068, 16
          %s1070 = scalar_lea.vmem [#allocation14], %s1069
          %1071 = dma.done %s1067, 256
        $region100: #{tpu_custom_call.1} parent=95 // pred_fallthru
          _
        // Predicated region
        $region101: #{tpu_custom_call.1} parent=95 // pred_check
          %p1072 = pneg %p285
        $region102: #{tpu_custom_call.1} parent=95 // pred_check_branch
          %1074 = sbr.rel (%p1072) target = $region104
        $region103: #{tpu_custom_call.1} parent=95 // pred_region
          %s1075 = sand.u32 %s42, 1
          %s1076 = scalar_lea.sflag [#allocation16], %s1075
          %s1077 = sand.u32 %s270, 1
          %s1078 = smul.addr %s1077, 16
          %s1079 = scalar_lea.vmem [#allocation15], %s1078
          %1080 = dma.done %s1076, 256
        $region104: #{tpu_custom_call.1} parent=95 // pred_fallthru
          _
        // Predicated region
        $region105: #{tpu_custom_call.1} parent=95 // pred_check
          %p1081 = pneg %p313
        $region106: #{tpu_custom_call.1} parent=95 // pred_check_branch
          %1083 = sbr.rel (%p1081) target = $region108
        $region107: #{tpu_custom_call.1} parent=95 // pred_region
          %s1084 = sand.u32 %s42, 1
          %s1085 = scalar_lea.sflag [#allocation16], %s1084
          %s1086 = sand.u32 %s298, 1
          %s1087 = smul.addr %s1086, 16
          %s1088 = scalar_lea.vmem [#allocation17], %s1087
          %1089 = dma.done %s1085, 256
        $region108: #{tpu_custom_call.1} parent=95 // pred_fallthru
          _
        // Predicated region
        $region109: #{tpu_custom_call.1} parent=95 // pred_check
          %p1090 = pneg %p341
        $region110: #{tpu_custom_call.1} parent=95 // pred_check_branch
          %1092 = sbr.rel (%p1090) target = $region112
        $region111: #{tpu_custom_call.1} parent=95 // pred_region
          %s1093 = sand.u32 %s326, 1
          %s1094 = scalar_lea.sflag [#allocation19], %s1093
          %s1095 = sand.u32 %s326, 1
          %s1096 = smul.addr %s1095, 16
          %s1097 = scalar_lea.vmem [#allocation18], %s1096
          %1098 = dma.done %s1094, 256
        $region112: #{tpu_custom_call.1} parent=95 // pred_fallthru
          _
      $region96: #{tpu_custom_call.1} parent=5 // pred_fallthru
        _
    $region6: #{tpu_custom_call.1} parent=1 // loop_footer
      %s40 = sadd.s32 1, %s36
    $region7: #{tpu_custom_call.1} parent=1 // loop_footer_branch
      %35 = sbr.rel target = $region3
    $region8: #{tpu_custom_call.1} parent=1 // loop_exit
      _
    %1099 = vsyncpa [#allocation3], 1
    %s1100 = scalar_lea.sflag [#allocation3], 1
    %1101 = vsyncpa %s1100, 1
    %1102 = vsyncpa [#allocation6], 1
    %s1103 = scalar_lea.sflag [#allocation6], 1
    %1104 = vsyncpa %s1103, 1
    %1105 = vsyncpa [#allocation9], 1
    %1106 = vsyncpa [#allocation12], 1
    %s1107 = scalar_lea.sflag [#allocation12], 1
    %1108 = vsyncpa %s1107, 1
    %1109 = vsyncpa [#allocation4], 1
    %s1110 = scalar_lea.sflag [#allocation4], 1
    %1111 = vsyncpa %s1110, 1
    %1112 = vsyncpa [#allocation16], 1
    %s1113 = scalar_lea.sflag [#allocation16], 1
    %1114 = vsyncpa %s1113, 1
    %1115 = vsyncpa [#allocation19], 1
    %s1116 = scalar_lea.sflag [#allocation19], 1
    %1117 = vsyncpa %s1116, 1

</llo_original>
